<compile_context>
chip_gen: v7x
topology: tpu7x:2x2x1
jax: 0.10.0
libtpu: 0.0.40
codegen_flags: <defaults>
</compile_context>

<pallas_src>
import functools

import jax
import jax.numpy as jnp
from jax.experimental import pallas as pl
from jax.experimental.pallas import tpu as pltpu


def mha_kernel(x_ref, wq_ref, bq_ref, wk_ref, bk_ref, wv_ref, bv_ref,
               wfc_ref, bfc_ref, *rest, bt, seq_len, d_k, d_v, group,
               inv_temperature, mm_dtype, need_weights):
    """One grid step == (one batch tile) x (one group of `group` heads)."""
    if need_weights:
        out_ref, attn_ref, acc_ref = rest
    else:
        out_ref, acc_ref = rest
        attn_ref = None

    g = pl.program_id(1)
    n_groups = pl.num_programs(1)
    rows = bt * seq_len

    # Single cast of x to the MXU operand dtype (no f32 round-trip each step).
    x_mm = x_ref[...].reshape(rows, -1).astype(mm_dtype)

    # Grouped projections: N = group*d_k / group*d_v keeps the MXU lanes busy.
    # Weights are VMEM-resident; slice this group's (D, G*d) block by index.
    q = (jnp.dot(x_mm, wq_ref[g], preferred_element_type=jnp.float32)
         + bq_ref[g]) * inv_temperature                        # (rows, G*d_k)
    k = jnp.dot(x_mm, wk_ref[g],
                preferred_element_type=jnp.float32) + bk_ref[g]  # (rows, G*d_k)
    v = jnp.dot(x_mm, wv_ref[g],
                preferred_element_type=jnp.float32) + bv_ref[g]  # (rows, G*d_v)

    # Per-head attention inside the group (static loop over G heads).
    ctx_cols = []
    for hh in range(group):
        qh = q[:, hh * d_k:(hh + 1) * d_k].reshape(bt, seq_len, d_k)
        kh = k[:, hh * d_k:(hh + 1) * d_k].reshape(bt, seq_len, d_k)
        vh = v[:, hh * d_v:(hh + 1) * d_v].reshape(bt, seq_len, d_v)

        # Scores: contract the last axes directly (no explicit transpose);
        # Q/K kept in f32 so the softmax logits are not quantized.
        s = jnp.einsum('bqd,bkd->bqk', qh, kh,
                       preferred_element_type=jnp.float32)     # (bt, L, L)
        # TODO(synk): optional attention mask (masked_fill(-inf)) not wired in.
        s = s - jnp.max(s, axis=-1, keepdims=True)
        e = jnp.exp(s)
        denom = jnp.sum(e, axis=-1, keepdims=True)
        # EUP reciprocal (approx): attn rows sum to 1 only to ~1e-3 rel. error.
        a = e * pl.reciprocal(denom, approx=True)

        if need_weights:
            attn_ref[hh] = a.astype(attn_ref.dtype)

        ctx = jnp.einsum('bqk,bkd->bqd', a.astype(mm_dtype), vh.astype(mm_dtype),
                         preferred_element_type=jnp.float32)   # (bt, L, d_v)
        ctx_cols.append(ctx.reshape(rows, d_v))

    ctx_g = ctx_cols[0] if group == 1 else jnp.concatenate(ctx_cols, axis=-1)

    # Per-group contribution to the fc output:
    #   concat_h(ctx_h) @ Wfc == sum_g concat_{h in g}(ctx_h) @ Wfc[g]
    y_g = jnp.dot(ctx_g.astype(mm_dtype), wfc_ref[g],
                  preferred_element_type=jnp.float32)          # (rows, D)

    @pl.when(g == 0)
    def _():
        # dropout(p=0) + residual (exact f32 x) + fc bias, added exactly once.
        x_res = x_ref[...].reshape(rows, -1).astype(jnp.float32)
        acc_ref[...] = x_res + bfc_ref[...] + y_g

    @pl.when(g != 0)
    def _():
        acc_ref[...] = acc_ref[...] + y_g

    @pl.when(g == n_groups - 1)
    def _():
        out_ref[...] = acc_ref[...].reshape(bt, seq_len, -1).astype(out_ref.dtype)


def _head_group(n_head, d_k, target_n=256):
    """Smallest divisor of n_head such that G*d_k >= target_n (MXU N-dim),
    else all heads in one group."""
    for cand in range(1, n_head + 1):
        if n_head % cand == 0 and cand * d_k >= target_n:
            return cand
    return n_head


def _vmem_footprint(bt, L, D, n_head, d_k, d_v, group,
                    mm_bytes, x_bytes, attn_bytes):
    """Approximate per-step VMEM footprint (bytes)."""
    rows = bt * L
    f = 0
    f += 2 * rows * D * x_bytes                     # x block, double-buffered
    f += 2 * rows * D * x_bytes                     # out block, double-buffered
    f += 2 * group * bt * L * L * attn_bytes        # attn block, double-buffered
    f += rows * D * 4                               # f32 accumulator scratch
    f += 4 * rows * group * max(d_k, d_v) * 4       # q / k / v / ctx intermediates
    f += 4 * bt * L * L * 4                         # scores / exp / probs live set
    f += (3 * n_head * d_k + n_head * d_v) * D * mm_bytes   # resident weights
    return f


def _pick_batch_tile(B, L, D, n_head, d_k, d_v, group,
                     mm_bytes, x_bytes, attn_bytes, budget_bytes, target_rows):
    cands = [c for c in range(1, B + 1) if B % c == 0]
    if B > 1:
        # Keep >= 2 steps on the parallel axis so both v7x TensorCores get work.
        cands = [c for c in cands if c <= B // 2] or [1]
    best = 1
    for c in cands:
        if c * L > max(target_rows, L):
            continue
        if _vmem_footprint(c, L, D, n_head, d_k, d_v, group,
                           mm_bytes, x_bytes, attn_bytes) > budget_bytes:
            continue
        best = max(best, c)
    return best


def prepare_mha_params(params, *, n_head, d_k, d_v, matmul_dtype="auto",
                       target_n=256):
    """One-time head-group-major re-layout of the weights.

    Hoisted out of the per-forward path (the reshapes/transposes/casts are
    D*D-sized XLA ops) -- call once, e.g. right after loading the checkpoint.
    matmul_dtype: "auto" -> bf16 MXU operands (f32 accumulation); None -> f32.
    """
    wq, bq, wk, bk, wv, bv, wfc, bfc = params
    D = wq.shape[0]

    if isinstance(matmul_dtype, str) and matmul_dtype == "auto":
        matmul_dtype = jnp.bfloat16     # rated MXU path on v5e/v6e/v7x
    mm_dtype = jnp.float32 if matmul_dtype is None else matmul_dtype

    group = _head_group(n_head, d_k, target_n)
    ng = n_head // group

    wq_g = wq.reshape(D, ng, group * d_k).transpose(1, 0, 2).astype(mm_dtype)
    wk_g = wk.reshape(D, ng, group * d_k).transpose(1, 0, 2).astype(mm_dtype)
    wv_g = wv.reshape(D, ng, group * d_v).transpose(1, 0, 2).astype(mm_dtype)
    wfc_g = wfc.reshape(ng, group * d_v, D).astype(mm_dtype)
    bq_g = bq.reshape(1, ng, group * d_k).transpose(1, 0, 2).astype(jnp.float32)
    bk_g = bk.reshape(1, ng, group * d_k).transpose(1, 0, 2).astype(jnp.float32)
    bv_g = bv.reshape(1, ng, group * d_v).transpose(1, 0, 2).astype(jnp.float32)
    bfc_f = bfc.astype(jnp.float32)

    return dict(weights=(wq_g, bq_g, wk_g, bk_g, wv_g, bv_g, wfc_g, bfc_f),
                n_head=n_head, d_k=d_k, d_v=d_v, d_model=D,
                group=group, mm_dtype=mm_dtype)


def multi_head_attention(x, prepared, *, need_weights=True, attn_dtype=None,
                         target_rows=512):
    """Forward pass.  Returns (out, attn) with attn=None if need_weights=False."""
    B, L, D = x.shape
    n_head, d_k, d_v = prepared["n_head"], prepared["d_k"], prepared["d_v"]
    group, mm_dtype = prepared["group"], prepared["mm_dtype"]
    assert D == prepared["d_model"]
    ng = n_head // group
    wq_g, bq_g, wk_g, bk_g, wv_g, bv_g, wfc_g, bfc_f = prepared["weights"]

    inv_temperature = 1.0 / (float(D) ** 0.5)   # module uses sqrt(d_model)
    attn_dtype = x.dtype if attn_dtype is None else attn_dtype

    # VMEM budgets: scoped limit from physical capacity (v5e/v6e 128 MiB ->
    # ~100 MiB, v7x 64 MiB -> 48 MiB); tile budget leaves pipeline headroom.
    try:
        phys = int(pltpu.get_tpu_info().vmem_capacity_bytes)
    except Exception:
        phys = 64 * 1024 * 1024
    vmem_limit = int(min(phys - (16 << 20), 100 << 20))
    budget = int(vmem_limit * 0.6)

    mm_bytes = jnp.dtype(mm_dtype).itemsize
    x_bytes = jnp.dtype(x.dtype).itemsize
    attn_bytes = jnp.dtype(attn_dtype).itemsize if need_weights else 0

    bt = _pick_batch_tile(B, L, D, n_head, d_k, d_v, group,
                          mm_bytes, x_bytes, attn_bytes, budget, target_rows)
    grid = (B // bt, ng)

    kernel = functools.partial(
        mha_kernel, bt=bt, seq_len=L, d_k=d_k, d_v=d_v, group=group,
        inv_temperature=inv_temperature, mm_dtype=mm_dtype,
        need_weights=need_weights)

    # All weights/biases resident in VMEM: full-array blocks, constant index
    # maps (block index never changes -> fetched once, no per-step DMA).
    def resident(arr):
        return pl.BlockSpec(arr.shape, lambda b, g: (0,) * arr.ndim)

    in_specs = [
        pl.BlockSpec((bt, L, D), lambda b, g: (b, 0, 0)),      # x
        resident(wq_g), resident(bq_g),
        resident(wk_g), resident(bk_g),
        resident(wv_g), resident(bv_g),
        resident(wfc_g), resident(bfc_f),
    ]

    out_shapes = [jax.ShapeDtypeStruct((B, L, D), x.dtype)]
    out_specs = [pl.BlockSpec((bt, L, D), lambda b, g: (b, 0, 0))]  # accum over g
    if need_weights:
        # TODO(synk): if L is not a multiple of 128 the attn writeback uses
        #             masked stores; padding the last dim would be lane-dense.
        out_shapes.append(jax.ShapeDtypeStruct((n_head, B, L, L), attn_dtype))
        out_specs.append(
            pl.BlockSpec((group, bt, L, L), lambda b, g: (g, b, 0, 0)))

    results = pl.pallas_call(
        kernel,
        out_shape=tuple(out_shapes),
        grid=grid,
        in_specs=in_specs,
        out_specs=tuple(out_specs),
        scratch_shapes=[pltpu.VMEM((bt * L, D), jnp.float32)],
        compiler_params=pltpu.CompilerParams(
            dimension_semantics=("parallel", "arbitrary"),
            vmem_limit_bytes=vmem_limit),
    )(x, wq_g, bq_g, wk_g, bk_g, wv_g, bv_g, wfc_g, bfc_f)

    out = results[0]
    if need_weights:
        # (n_head, B, L, L) -> (n_head*B, L, L): head-major stacking, as torch.
        attn = results[1].reshape(n_head * B, L, L)
        return out, attn
    return out, None


def reference_mha(x, params, *, n_head, d_k, d_v):
    """Pure-JAX mirror of the PyTorch forward (for verification)."""
    wq, bq, wk, bk, wv, bv, wfc, bfc = params
    B, L, D = x.shape
    temp = float(D) ** 0.5

    def proj(w, b, dh):
        y = x @ w + b  # (B, L, n_head*dh)
        y = y.reshape(B, L, n_head, dh).transpose(2, 0, 1, 3).reshape(-1, L, dh)
        return y

    q = proj(wq, bq, d_k)
    k = proj(wk, bk, d_k)
    v = proj(wv, bv, d_v)

    attn = jnp.einsum('bqd,bkd->bqk', q, k) / temp
    attn = jax.nn.softmax(attn, axis=2)
    out = jnp.einsum('bqk,bkd->bqd', attn, v)          # (n_head*B, L, d_v)
    out = out.reshape(n_head, B, L, d_v).transpose(1, 2, 0, 3).reshape(B, L, -1)
    out = out @ wfc + bfc + x
    return out, attn


if __name__ == "__main__":
    # Small deterministic config
    B, L, d_model = 2, 8, 32
    n_head, d_k, d_v = 2, 16, 16

    key = jax.random.PRNGKey(0)
    keys = jax.random.split(key, 9)
    scale = 0.05
    x = jax.random.normal(keys[0], (B, L, d_model), dtype=jnp.float32)

    params = (
        scale * jax.random.normal(keys[1], (d_model, n_head * d_k), jnp.float32),  # Wq
        scale * jax.random.normal(keys[2], (1, n_head * d_k), jnp.float32),        # bq
        scale * jax.random.normal(keys[3], (d_model, n_head * d_k), jnp.float32),  # Wk
        scale * jax.random.normal(keys[4], (1, n_head * d_k), jnp.float32),        # bk
        scale * jax.random.normal(keys[5], (d_model, n_head * d_v), jnp.float32),  # Wv
        scale * jax.random.normal(keys[6], (1, n_head * d_v), jnp.float32),        # bv
        scale * jax.random.normal(keys[7], (n_head * d_v, d_model), jnp.float32),  # Wfc
        scale * jax.random.normal(keys[8], (1, d_model), jnp.float32),             # bfc
    )

    out_expected, attn_expected = reference_mha(
        x, params, n_head=n_head, d_k=d_k, d_v=d_v)

    # 1) f32 MXU operands, attention weights returned: strict check.
    prep_f32 = prepare_mha_params(params, n_head=n_head, d_k=d_k, d_v=d_v,
                                  matmul_dtype=None)
    out, attn = multi_head_attention(x, prep_f32, need_weights=True)
    out = jax.block_until_ready(out)
    attn = jax.block_until_ready(attn)
    assert out.shape == (B, L, d_model)
    assert attn.shape == (n_head * B, L, L)
    # Tolerance accounts for the approximate EUP reciprocal in the softmax.
    assert jnp.allclose(out, out_expected, atol=5e-3, rtol=5e-3)
    assert jnp.allclose(attn, attn_expected, atol=5e-3, rtol=5e-3)

    # 2) Default path: bf16 MXU operands and the attention-probability output
    #    dropped entirely (largest HBM stream removed when not needed).
    prep_auto = prepare_mha_params(params, n_head=n_head, d_k=d_k, d_v=d_v)
    out_fast, attn_none = multi_head_attention(x, prep_auto, need_weights=False)
    out_fast = jax.block_until_ready(out_fast)
    assert attn_none is None
    assert jnp.allclose(out_fast, out_expected, atol=2e-2, rtol=2e-2)

    print("KERNEL_OK")
</pallas_src>

<mosaic_0001>
module attributes {stable_mosaic.version = 11 : i64} {
  func.func @mha_kernel(%arg0: i32, %arg1: i32, %arg2: memref<1x8x32xf32, #tpu.memory_space<vmem>>, %arg3: memref<1x32x32xf32, #tpu.memory_space<vmem>>, %arg4: memref<1x1x32xf32, #tpu.memory_space<vmem>>, %arg5: memref<1x32x32xf32, #tpu.memory_space<vmem>>, %arg6: memref<1x1x32xf32, #tpu.memory_space<vmem>>, %arg7: memref<1x32x32xf32, #tpu.memory_space<vmem>>, %arg8: memref<1x1x32xf32, #tpu.memory_space<vmem>>, %arg9: memref<1x32x32xf32, #tpu.memory_space<vmem>>, %arg10: memref<1x32xf32, #tpu.memory_space<vmem>>, %arg11: memref<1x8x32xf32, #tpu.memory_space<vmem>>, %arg12: memref<2x1x8x8xf32, #tpu.memory_space<vmem>>, %arg13: memref<8x32xf32, #tpu.memory_space<vmem>>) attributes {dimension_semantics = [#tpu.dimension_semantics<parallel>, #tpu.dimension_semantics<arbitrary>], iteration_bounds = array<i64: 2, 1>, scalar_prefetch = 0 : i64, scratch_operands = 1 : i64, tpu.core_type = #tpu.core_type<tc>, window_params = [{transform_indices = @transform_0, window_bounds = array<i64: 1, 8, 32>}, {pipeline_mode = #tpu.pipeline_mode<synchronous>, transform_indices = @transform_1, window_bounds = array<i64: 1, 32, 32>}, {pipeline_mode = #tpu.pipeline_mode<synchronous>, transform_indices = @transform_2, window_bounds = array<i64: 1, 1, 32>}, {pipeline_mode = #tpu.pipeline_mode<synchronous>, transform_indices = @transform_3, window_bounds = array<i64: 1, 32, 32>}, {pipeline_mode = #tpu.pipeline_mode<synchronous>, transform_indices = @transform_4, window_bounds = array<i64: 1, 1, 32>}, {pipeline_mode = #tpu.pipeline_mode<synchronous>, transform_indices = @transform_5, window_bounds = array<i64: 1, 32, 32>}, {pipeline_mode = #tpu.pipeline_mode<synchronous>, transform_indices = @transform_6, window_bounds = array<i64: 1, 1, 32>}, {pipeline_mode = #tpu.pipeline_mode<synchronous>, transform_indices = @transform_7, window_bounds = array<i64: 1, 32, 32>}, {pipeline_mode = #tpu.pipeline_mode<synchronous>, transform_indices = @transform_8, window_bounds = array<i64: 1, 32>}, {transform_indices = @transform_9, window_bounds = array<i64: 1, 8, 32>}, {transform_indices = @transform_10, window_bounds = array<i64: 2, 1, 8, 8>}]} {
    %c0 = arith.constant 0 : index
    %c0_0 = arith.constant 0 : index
    %c0_1 = arith.constant 0 : index
    %0 = vector.load %arg2[%c0, %c0_0, %c0_1] : memref<1x8x32xf32, #tpu.memory_space<vmem>>, vector<1x8x32xf32>
    %1 = vector.shape_cast %0 : vector<1x8x32xf32> to vector<8x32xf32>
    %2 = arith.index_cast %arg1 : i32 to index
    %c0_2 = arith.constant 0 : index
    %c0_3 = arith.constant 0 : index
    %3 = vector.load %arg3[%2, %c0_2, %c0_3] : memref<1x32x32xf32, #tpu.memory_space<vmem>>, vector<1x32x32xf32>
    %4 = vector.shape_cast %3 : vector<1x32x32xf32> to vector<32x32xf32>
    %cst = arith.constant dense<0.000000e+00> : vector<8x32xf32>
    %5 = tpu.matmul %1, %4, %cst {dimension_numbers = #tpu.dot_dimension_numbers<[1], [0], [0], [1], [0, 0, 1, 1], [], []>} : vector<8x32xf32>, vector<32x32xf32>, vector<8x32xf32> -> vector<8x32xf32>
    %6 = arith.index_cast %arg1 : i32 to index
    %c0_4 = arith.constant 0 : index
    %c0_5 = arith.constant 0 : index
    %7 = vector.load %arg4[%6, %c0_4, %c0_5] : memref<1x1x32xf32, #tpu.memory_space<vmem>>, vector<1x1x32xf32>
    %8 = vector.shape_cast %7 : vector<1x1x32xf32> to vector<1x32xf32>
    %9 = vector.broadcast %8 : vector<1x32xf32> to vector<8x32xf32>
    %10 = arith.addf %5, %9 : vector<8x32xf32>
    %cst_6 = arith.constant 0.176776692 : f32
    %11 = vector.broadcast %cst_6 : f32 to vector<8x32xf32>
    %12 = arith.mulf %10, %11 : vector<8x32xf32>
    %13 = arith.index_cast %arg1 : i32 to index
    %c0_7 = arith.constant 0 : index
    %c0_8 = arith.constant 0 : index
    %14 = vector.load %arg5[%13, %c0_7, %c0_8] : memref<1x32x32xf32, #tpu.memory_space<vmem>>, vector<1x32x32xf32>
    %15 = vector.shape_cast %14 : vector<1x32x32xf32> to vector<32x32xf32>
    %cst_9 = arith.constant dense<0.000000e+00> : vector<8x32xf32>
    %16 = tpu.matmul %1, %15, %cst_9 {dimension_numbers = #tpu.dot_dimension_numbers<[1], [0], [0], [1], [0, 0, 1, 1], [], []>} : vector<8x32xf32>, vector<32x32xf32>, vector<8x32xf32> -> vector<8x32xf32>
    %17 = arith.index_cast %arg1 : i32 to index
    %c0_10 = arith.constant 0 : index
    %c0_11 = arith.constant 0 : index
    %18 = vector.load %arg6[%17, %c0_10, %c0_11] : memref<1x1x32xf32, #tpu.memory_space<vmem>>, vector<1x1x32xf32>
    %19 = vector.shape_cast %18 : vector<1x1x32xf32> to vector<1x32xf32>
    %20 = vector.broadcast %19 : vector<1x32xf32> to vector<8x32xf32>
    %21 = arith.addf %16, %20 : vector<8x32xf32>
    %22 = arith.index_cast %arg1 : i32 to index
    %c0_12 = arith.constant 0 : index
    %c0_13 = arith.constant 0 : index
    %23 = vector.load %arg7[%22, %c0_12, %c0_13] : memref<1x32x32xf32, #tpu.memory_space<vmem>>, vector<1x32x32xf32>
    %24 = vector.shape_cast %23 : vector<1x32x32xf32> to vector<32x32xf32>
    %cst_14 = arith.constant dense<0.000000e+00> : vector<8x32xf32>
    %25 = tpu.matmul %1, %24, %cst_14 {dimension_numbers = #tpu.dot_dimension_numbers<[1], [0], [0], [1], [0, 0, 1, 1], [], []>} : vector<8x32xf32>, vector<32x32xf32>, vector<8x32xf32> -> vector<8x32xf32>
    %26 = arith.index_cast %arg1 : i32 to index
    %c0_15 = arith.constant 0 : index
    %c0_16 = arith.constant 0 : index
    %27 = vector.load %arg8[%26, %c0_15, %c0_16] : memref<1x1x32xf32, #tpu.memory_space<vmem>>, vector<1x1x32xf32>
    %28 = vector.shape_cast %27 : vector<1x1x32xf32> to vector<1x32xf32>
    %29 = vector.broadcast %28 : vector<1x32xf32> to vector<8x32xf32>
    %30 = arith.addf %25, %29 : vector<8x32xf32>
    %31 = vector.extract_strided_slice %12 {offsets = [0, 0], sizes = [8, 16], strides = [1, 1]} : vector<8x32xf32> to vector<8x16xf32>
    %32 = vector.shape_cast %31 : vector<8x16xf32> to vector<1x8x16xf32>
    %33 = vector.extract_strided_slice %21 {offsets = [0, 0], sizes = [8, 16], strides = [1, 1]} : vector<8x32xf32> to vector<8x16xf32>
    %34 = vector.shape_cast %33 : vector<8x16xf32> to vector<1x8x16xf32>
    %35 = vector.extract_strided_slice %30 {offsets = [0, 0], sizes = [8, 16], strides = [1, 1]} : vector<8x32xf32> to vector<8x16xf32>
    %36 = vector.shape_cast %35 : vector<8x16xf32> to vector<1x8x16xf32>
    "tpu.trace_start"() <{level = 10 : i32, message = "bqd,bkd->bqk"}> : () -> ()
    %cst_17 = arith.constant dense<0.000000e+00> : vector<1x8x8xf32>
    %37 = tpu.matmul %32, %34, %cst_17 {dimension_numbers = #tpu.dot_dimension_numbers<[2], [2], [1], [1], [0, 0, 0, 1, 1, 1], [0], [0]>} : vector<1x8x16xf32>, vector<1x8x16xf32>, vector<1x8x8xf32> -> vector<1x8x8xf32>
    "tpu.trace_stop"() : () -> ()
    %cst_18 = arith.constant dense<0xFF800000> : vector<1x8xf32>
    %38 = vector.multi_reduction <maximumf>, %37, %cst_18 [2] : vector<1x8x8xf32> to vector<1x8xf32>
    %39 = vector.shape_cast %38 : vector<1x8xf32> to vector<1x8x1xf32>
    %40 = vector.broadcast %39 : vector<1x8x1xf32> to vector<1x8x8xf32>
    %41 = arith.subf %37, %40 : vector<1x8x8xf32>
    %42 = math.exp %41 : vector<1x8x8xf32>
    %cst_19 = arith.constant dense<0.000000e+00> : vector<1x8xf32>
    %43 = vector.multi_reduction <add>, %42, %cst_19 [2] : vector<1x8x8xf32> to vector<1x8xf32>
    %44 = vector.shape_cast %43 : vector<1x8xf32> to vector<1x8x1xf32>
    %45 = tpu.reciprocal %44 {approx = true} : vector<1x8x1xf32> -> vector<1x8x1xf32>
    %46 = vector.broadcast %45 : vector<1x8x1xf32> to vector<1x8x8xf32>
    %47 = arith.mulf %42, %46 : vector<1x8x8xf32>
    %c0_20 = arith.constant 0 : index
    %c0_21 = arith.constant 0 : index
    %c0_22 = arith.constant 0 : index
    %c0_23 = arith.constant 0 : index
    %48 = vector.load %arg12[%c0_20, %c0_21, %c0_22, %c0_23] : memref<2x1x8x8xf32, #tpu.memory_space<vmem>>, vector<1x1x8x8xf32>
    %49 = vector.shape_cast %48 : vector<1x1x8x8xf32> to vector<1x8x8xf32>
    %50 = vector.shape_cast %47 : vector<1x8x8xf32> to vector<1x1x8x8xf32>
    tpu.vector_store %arg12[%c0_20, %c0_21, %c0_22, %c0_23], %50 {strides = array<i32>} : memref<2x1x8x8xf32, #tpu.memory_space<vmem>>, vector<1x1x8x8xf32>,
    "tpu.trace_start"() <{level = 10 : i32, message = "bqk,bkd->bqd"}> : () -> ()
    %cst_24 = arith.constant dense<0.000000e+00> : vector<1x8x16xf32>
    %51 = tpu.matmul %47, %36, %cst_24 {dimension_numbers = #tpu.dot_dimension_numbers<[2], [1], [1], [2], [0, 0, 0, 1, 1, 2], [0], [0]>} : vector<1x8x8xf32>, vector<1x8x16xf32>, vector<1x8x16xf32> -> vector<1x8x16xf32>
    "tpu.trace_stop"() : () -> ()
    %52 = vector.shape_cast %51 : vector<1x8x16xf32> to vector<8x16xf32>
    %53 = vector.extract_strided_slice %12 {offsets = [0, 16], sizes = [8, 16], strides = [1, 1]} : vector<8x32xf32> to vector<8x16xf32>
    %54 = vector.shape_cast %53 : vector<8x16xf32> to vector<1x8x16xf32>
    %55 = vector.extract_strided_slice %21 {offsets = [0, 16], sizes = [8, 16], strides = [1, 1]} : vector<8x32xf32> to vector<8x16xf32>
    %56 = vector.shape_cast %55 : vector<8x16xf32> to vector<1x8x16xf32>
    %57 = vector.extract_strided_slice %30 {offsets = [0, 16], sizes = [8, 16], strides = [1, 1]} : vector<8x32xf32> to vector<8x16xf32>
    %58 = vector.shape_cast %57 : vector<8x16xf32> to vector<1x8x16xf32>
    "tpu.trace_start"() <{level = 10 : i32, message = "bqd,bkd->bqk"}> : () -> ()
    %cst_25 = arith.constant dense<0.000000e+00> : vector<1x8x8xf32>
    %59 = tpu.matmul %54, %56, %cst_25 {dimension_numbers = #tpu.dot_dimension_numbers<[2], [2], [1], [1], [0, 0, 0, 1, 1, 1], [0], [0]>} : vector<1x8x16xf32>, vector<1x8x16xf32>, vector<1x8x8xf32> -> vector<1x8x8xf32>
    "tpu.trace_stop"() : () -> ()
    %cst_26 = arith.constant dense<0xFF800000> : vector<1x8xf32>
    %60 = vector.multi_reduction <maximumf>, %59, %cst_26 [2] : vector<1x8x8xf32> to vector<1x8xf32>
    %61 = vector.shape_cast %60 : vector<1x8xf32> to vector<1x8x1xf32>
    %62 = vector.broadcast %61 : vector<1x8x1xf32> to vector<1x8x8xf32>
    %63 = arith.subf %59, %62 : vector<1x8x8xf32>
    %64 = math.exp %63 : vector<1x8x8xf32>
    %cst_27 = arith.constant dense<0.000000e+00> : vector<1x8xf32>
    %65 = vector.multi_reduction <add>, %64, %cst_27 [2] : vector<1x8x8xf32> to vector<1x8xf32>
    %66 = vector.shape_cast %65 : vector<1x8xf32> to vector<1x8x1xf32>
    %67 = tpu.reciprocal %66 {approx = true} : vector<1x8x1xf32> -> vector<1x8x1xf32>
    %68 = vector.broadcast %67 : vector<1x8x1xf32> to vector<1x8x8xf32>
    %69 = arith.mulf %64, %68 : vector<1x8x8xf32>
    %c1 = arith.constant 1 : index
    %c0_28 = arith.constant 0 : index
    %c0_29 = arith.constant 0 : index
    %c0_30 = arith.constant 0 : index
    %70 = vector.load %arg12[%c1, %c0_28, %c0_29, %c0_30] : memref<2x1x8x8xf32, #tpu.memory_space<vmem>>, vector<1x1x8x8xf32>
    %71 = vector.shape_cast %70 : vector<1x1x8x8xf32> to vector<1x8x8xf32>
    %72 = vector.shape_cast %69 : vector<1x8x8xf32> to vector<1x1x8x8xf32>
    tpu.vector_store %arg12[%c1, %c0_28, %c0_29, %c0_30], %72 {strides = array<i32>} : memref<2x1x8x8xf32, #tpu.memory_space<vmem>>, vector<1x1x8x8xf32>,
    "tpu.trace_start"() <{level = 10 : i32, message = "bqk,bkd->bqd"}> : () -> ()
    %cst_31 = arith.constant dense<0.000000e+00> : vector<1x8x16xf32>
    %73 = tpu.matmul %69, %58, %cst_31 {dimension_numbers = #tpu.dot_dimension_numbers<[2], [1], [1], [2], [0, 0, 0, 1, 1, 2], [0], [0]>} : vector<1x8x8xf32>, vector<1x8x16xf32>, vector<1x8x16xf32> -> vector<1x8x16xf32>
    "tpu.trace_stop"() : () -> ()
    %74 = vector.shape_cast %73 : vector<1x8x16xf32> to vector<8x16xf32>
    %75 = tpu.concatenate %52, %74 in 1 : vector<8x16xf32>, vector<8x16xf32> -> vector<8x32xf32>
    %76 = arith.index_cast %arg1 : i32 to index
    %c0_32 = arith.constant 0 : index
    %c0_33 = arith.constant 0 : index
    %77 = vector.load %arg9[%76, %c0_32, %c0_33] : memref<1x32x32xf32, #tpu.memory_space<vmem>>, vector<1x32x32xf32>
    %78 = vector.shape_cast %77 : vector<1x32x32xf32> to vector<32x32xf32>
    %cst_34 = arith.constant dense<0.000000e+00> : vector<8x32xf32>
    %79 = tpu.matmul %75, %78, %cst_34 {dimension_numbers = #tpu.dot_dimension_numbers<[1], [0], [0], [1], [0, 0, 1, 1], [], []>} : vector<8x32xf32>, vector<32x32xf32>, vector<8x32xf32> -> vector<8x32xf32>
    %c0_i32 = arith.constant 0 : i32
    %80 = arith.cmpi eq, %arg1, %c0_i32 : i32
    %81 = arith.extui %80 : i1 to i32
    %c0_i32_35 = arith.constant 0 : i32
    %82 = arith.cmpi ne, %81, %c0_i32_35 : i32
    scf.if %82 {
      %c0_40 = arith.constant 0 : index
      %c0_41 = arith.constant 0 : index
      %c0_42 = arith.constant 0 : index
      %89 = vector.load %arg2[%c0_40, %c0_41, %c0_42] : memref<1x8x32xf32, #tpu.memory_space<vmem>>, vector<1x8x32xf32>
      %90 = vector.shape_cast %89 : vector<1x8x32xf32> to vector<8x32xf32>
      %c0_43 = arith.constant 0 : index
      %c0_44 = arith.constant 0 : index
      %91 = vector.load %arg10[%c0_43, %c0_44] : memref<1x32xf32, #tpu.memory_space<vmem>>, vector<1x32xf32>
      %92 = vector.broadcast %91 : vector<1x32xf32> to vector<8x32xf32>
      %93 = arith.addf %90, %92 : vector<8x32xf32>
      %94 = arith.addf %93, %79 : vector<8x32xf32>
      %c0_45 = arith.constant 0 : index
      %c0_46 = arith.constant 0 : index
      %95 = vector.load %arg13[%c0_45, %c0_46] : memref<8x32xf32, #tpu.memory_space<vmem>>, vector<8x32xf32>
      tpu.vector_store %arg13[%c0_45, %c0_46], %94 {strides = array<i32>} : memref<8x32xf32, #tpu.memory_space<vmem>>, vector<8x32xf32>,
    } else {
    }
    %c0_i32_36 = arith.constant 0 : i32
    %83 = arith.cmpi ne, %arg1, %c0_i32_36 : i32
    %84 = arith.extui %83 : i1 to i32
    %c0_i32_37 = arith.constant 0 : i32
    %85 = arith.cmpi ne, %84, %c0_i32_37 : i32
    scf.if %85 {
      %c0_40 = arith.constant 0 : index
      %c0_41 = arith.constant 0 : index
      %89 = vector.load %arg13[%c0_40, %c0_41] : memref<8x32xf32, #tpu.memory_space<vmem>>, vector<8x32xf32>
      %90 = arith.addf %89, %79 : vector<8x32xf32>
      %c0_42 = arith.constant 0 : index
      %c0_43 = arith.constant 0 : index
      %91 = vector.load %arg13[%c0_42, %c0_43] : memref<8x32xf32, #tpu.memory_space<vmem>>, vector<8x32xf32>
      tpu.vector_store %arg13[%c0_42, %c0_43], %90 {strides = array<i32>} : memref<8x32xf32, #tpu.memory_space<vmem>>, vector<8x32xf32>,
    } else {
    }
    %c0_i32_38 = arith.constant 0 : i32
    %86 = arith.cmpi eq, %arg1, %c0_i32_38 : i32
    %87 = arith.extui %86 : i1 to i32
    %c0_i32_39 = arith.constant 0 : i32
    %88 = arith.cmpi ne, %87, %c0_i32_39 : i32
    scf.if %88 {
      %c0_40 = arith.constant 0 : index
      %c0_41 = arith.constant 0 : index
      %89 = vector.load %arg13[%c0_40, %c0_41] : memref<8x32xf32, #tpu.memory_space<vmem>>, vector<8x32xf32>
      %90 = vector.shape_cast %89 : vector<8x32xf32> to vector<1x8x32xf32>
      %c0_42 = arith.constant 0 : index
      %c0_43 = arith.constant 0 : index
      %c0_44 = arith.constant 0 : index
      %91 = vector.load %arg11[%c0_42, %c0_43, %c0_44] : memref<1x8x32xf32, #tpu.memory_space<vmem>>, vector<1x8x32xf32>
      tpu.vector_store %arg11[%c0_42, %c0_43, %c0_44], %90 {strides = array<i32>} : memref<1x8x32xf32, #tpu.memory_space<vmem>>, vector<1x8x32xf32>,
    } else {
    }
    return
  }
  func.func @transform_0(%arg0: i32, %arg1: i32) -> (i32, i32, i32) {
    %c0_i32 = arith.constant 0 : i32
    %c0_i32_0 = arith.constant 0 : i32
    %c0_i32_1 = arith.constant 0 : i32
    return %arg0, %c0_i32, %c0_i32_0 : i32, i32, i32
  }
  func.func @transform_1(%arg0: i32, %arg1: i32) -> (i32, i32, i32) {
    %c0_i32 = arith.constant 0 : i32
    %c0_i32_0 = arith.constant 0 : i32
    %c0_i32_1 = arith.constant 0 : i32
    %c0_i32_2 = arith.constant 0 : i32
    return %c0_i32, %c0_i32_0, %c0_i32_1 : i32, i32, i32
  }
  func.func @transform_2(%arg0: i32, %arg1: i32) -> (i32, i32, i32) {
    %c0_i32 = arith.constant 0 : i32
    %c0_i32_0 = arith.constant 0 : i32
    %c0_i32_1 = arith.constant 0 : i32
    %c0_i32_2 = arith.constant 0 : i32
    return %c0_i32, %c0_i32_0, %c0_i32_1 : i32, i32, i32
  }
  func.func @transform_3(%arg0: i32, %arg1: i32) -> (i32, i32, i32) {
    %c0_i32 = arith.constant 0 : i32
    %c0_i32_0 = arith.constant 0 : i32
    %c0_i32_1 = arith.constant 0 : i32
    %c0_i32_2 = arith.constant 0 : i32
    return %c0_i32, %c0_i32_0, %c0_i32_1 : i32, i32, i32
  }
  func.func @transform_4(%arg0: i32, %arg1: i32) -> (i32, i32, i32) {
    %c0_i32 = arith.constant 0 : i32
    %c0_i32_0 = arith.constant 0 : i32
    %c0_i32_1 = arith.constant 0 : i32
    %c0_i32_2 = arith.constant 0 : i32
    return %c0_i32, %c0_i32_0, %c0_i32_1 : i32, i32, i32
  }
  func.func @transform_5(%arg0: i32, %arg1: i32) -> (i32, i32, i32) {
    %c0_i32 = arith.constant 0 : i32
    %c0_i32_0 = arith.constant 0 : i32
    %c0_i32_1 = arith.constant 0 : i32
    %c0_i32_2 = arith.constant 0 : i32
    return %c0_i32, %c0_i32_0, %c0_i32_1 : i32, i32, i32
  }
  func.func @transform_6(%arg0: i32, %arg1: i32) -> (i32, i32, i32) {
    %c0_i32 = arith.constant 0 : i32
    %c0_i32_0 = arith.constant 0 : i32
    %c0_i32_1 = arith.constant 0 : i32
    %c0_i32_2 = arith.constant 0 : i32
    return %c0_i32, %c0_i32_0, %c0_i32_1 : i32, i32, i32
  }
  func.func @transform_7(%arg0: i32, %arg1: i32) -> (i32, i32, i32) {
    %c0_i32 = arith.constant 0 : i32
    %c0_i32_0 = arith.constant 0 : i32
    %c0_i32_1 = arith.constant 0 : i32
    %c0_i32_2 = arith.constant 0 : i32
    return %c0_i32, %c0_i32_0, %c0_i32_1 : i32, i32, i32
  }
  func.func @transform_8(%arg0: i32, %arg1: i32) -> (i32, i32) {
    %c0_i32 = arith.constant 0 : i32
    %c0_i32_0 = arith.constant 0 : i32
    %c0_i32_1 = arith.constant 0 : i32
    return %c0_i32, %c0_i32_0 : i32, i32
  }
  func.func @transform_9(%arg0: i32, %arg1: i32) -> (i32, i32, i32) {
    %c0_i32 = arith.constant 0 : i32
    %c0_i32_0 = arith.constant 0 : i32
    %c0_i32_1 = arith.constant 0 : i32
    return %arg0, %c0_i32, %c0_i32_0 : i32, i32, i32
  }
  func.func @transform_10(%arg0: i32, %arg1: i32) -> (i32, i32, i32, i32) {
    %c0_i32 = arith.constant 0 : i32
    %c0_i32_0 = arith.constant 0 : i32
    %c0_i32_1 = arith.constant 0 : i32
    return %arg1, %arg0, %c0_i32, %c0_i32_0 : i32, i32, i32, i32
  }
}

</mosaic_0001>

<llo_original>
// kernel: tpu_custom_call.1
$region0: #{tpu_custom_call.1}
  #allocation0 [shape = 'u32[]', space=smem, size = 0x4, offset = 0x4, fixed_abs, tag = 'smem constant byte address 0x4 - core index']
  #allocation1 [shape = 'u32[144,128]{1,0:T(1,128)}', space=vmem, size = 0x12000, scoped, tag = 'internal scratch']
  #allocation2 [shape = 'f32[8,32]{1,0:T(8,128)}', space=vmem, size = 0x1000, scoped, tag = 'scratch operand']
  %s0 = inlined_call_operand.hbm [shape: f32[2,8,32], index: 0, kind: input, shape index: {}]
  %s1 = inlined_call_operand.hbm [shape: f32[1,32,32], index: 1, kind: input, shape index: {}]
  %s2 = inlined_call_operand.vmem [shape: f32[1,1,32], index: 2, kind: input, shape index: {}]
  %s3 = inlined_call_operand.hbm [shape: f32[1,32,32], index: 3, kind: input, shape index: {}]
  %s4 = inlined_call_operand.vmem [shape: f32[1,1,32], index: 4, kind: input, shape index: {}]
  %s5 = inlined_call_operand.hbm [shape: f32[1,32,32], index: 5, kind: input, shape index: {}]
  %s6 = inlined_call_operand.vmem [shape: f32[1,1,32], index: 6, kind: input, shape index: {}]
  %s7 = inlined_call_operand.hbm [shape: f32[1,32,32], index: 7, kind: input, shape index: {}]
  %s8 = inlined_call_operand.vmem [shape: f32[1,32], index: 8, kind: input, shape index: {}]
  %s9 = inlined_call_operand.hbm [shape: f32[2,8,32], index: 9, kind: output, shape index: {0}]
  %s10 = inlined_call_operand.hbm [shape: f32[2,2,8,8], index: 10, kind: output, shape index: {1}]
  %11 = xla_tuple %s9, %s10
  %s12 = sld [smem:[#allocation0]]
  $region109: #{tpu_custom_call.1} parent=0
    _
  %s14 = ssub.s32 1, %s12
  %s15 = scalar_select 0, %s14, %s12
  $region1: #{tpu_custom_call.1} parent=0
    #allocation3 [shape = 'u8[8192]{0}', space=vmem, size = 0x2000, scoped, tag = 'input window, operand 0']
    #allocation4 [shape = 's32[2]{0}', space=sflag, size = 0x8, scoped, tag = 'scoped memory for tpu_custom_call.1']
    #allocation5 [shape = 's32[2]{0}', space=sflag, size = 0x8, scoped, tag = 'scoped memory for tpu_custom_call.1']
    #allocation6 [shape = 'u8[16384]{0}', space=vmem, size = 0x4000, scoped, tag = 'input window, operand 1, single buffered']
    #allocation7 [shape = 's32[1]{0}', space=sflag, size = 0x4, scoped, tag = 'scoped memory for tpu_custom_call.1']
    #allocation8 [shape = 'u8[16384]{0}', space=vmem, size = 0x4000, scoped, tag = 'input window, operand 3, single buffered']
    #allocation9 [shape = 'u8[16384]{0}', space=vmem, size = 0x4000, scoped, tag = 'input window, operand 5, single buffered']
    #allocation10 [shape = 's32[1]{0}', space=sflag, size = 0x4, scoped, tag = 'scoped memory for tpu_custom_call.1']
    #allocation11 [shape = 'u8[16384]{0}', space=vmem, size = 0x4000, scoped, tag = 'input window, operand 7, single buffered']
    #allocation12 [shape = 'u8[8192]{0}', space=vmem, size = 0x2000, scoped, tag = 'output window, operand 0']
    #allocation13 [shape = 'u8[16384]{0}', space=vmem, size = 0x4000, scoped, tag = 'output window, operand 1']
    #allocation14 [shape = 's32[2]{0}', space=sflag, size = 0x8, scoped, tag = 'scoped memory for tpu_custom_call.1']
    %16 = vsyncpa [#allocation4], 0
    %s17 = scalar_lea.sflag [#allocation4], 1
    %18 = vsyncpa %s17, 0
    %19 = vsyncpa [#allocation7], 0
    %20 = vsyncpa [#allocation10], 0
    %21 = vsyncpa [#allocation5], 0
    %s22 = scalar_lea.sflag [#allocation5], 1
    %23 = vsyncpa %s22, 0
    %24 = vsyncpa [#allocation14], 0
    %s25 = scalar_lea.sflag [#allocation14], 1
    %26 = vsyncpa %s25, 0
    loop: start=0, step=1, limit=4
    $region2: #{tpu_custom_call.1} parent=1 // loop_pre_header
      _
    $region3: #{tpu_custom_call.1} parent=1 // loop_header
      %s28 = sphi 0, %s32
      %p29 = scmp.ge.s32.totalorder %s28, 4
      %s35 = sphi 0, %s47
      %s36 = sphi 0, %s43
      %s37 = sphi 0, %s35
      %s38 = sphi 0, %s36
      %s39 = sphi 0, %s37
      %s40 = sphi 0, %s38
      %s50 = sphi 0, %s52
      %s53 = sphi 0, %s50
      %s54 = sphi 0, %s53
      %s70 = sphi 0, %s54
      %s74 = sphi 0, %s74
      %s76 = sphi 0, %s74
      %s77 = sphi 0, %s76
      %s91 = sphi 0, %s77
      %s95 = sphi 0, %s95
      %s97 = sphi 0, %s95
      %s98 = sphi 0, %s97
      %s112 = sphi 0, %s98
      %s116 = sphi 0, %s116
      %s118 = sphi 0, %s116
      %s119 = sphi 0, %s118
      %s133 = sphi 0, %s119
      %s137 = sphi 0, %s137
      %s139 = sphi 0, %s137
      %s140 = sphi 0, %s139
      %s154 = sphi 0, %s140
      %s158 = sphi 0, %s158
      %s160 = sphi 0, %s158
      %s161 = sphi 0, %s160
      %s175 = sphi 0, %s161
      %s179 = sphi 0, %s179
      %s181 = sphi 0, %s179
      %s182 = sphi 0, %s181
      %s196 = sphi 0, %s182
      %s200 = sphi 0, %s200
      %s202 = sphi 0, %s200
      %s203 = sphi 0, %s202
      %s217 = sphi 0, %s203
      %s221 = sphi 0, %s221
      %s223 = sphi 0, %s221
      %s224 = sphi 0, %s223
      %s238 = sphi 0, %s224
      %s244 = sphi 0, %s246
      %s247 = sphi 0, %s244
      %s248 = sphi 0, %s247
      %s264 = sphi 0, %s248
      %s272 = sphi 0, %s274
      %s275 = sphi 0, %s272
      %s276 = sphi 0, %s275
      %s292 = sphi 0, %s276
    $region4: #{tpu_custom_call.1} parent=1 // loop_header_branch
      %31 = sbr.rel (%p29) target = $region8
    $region5: #{tpu_custom_call.1} parent=1 // loop_body
      %s33 = ssub.s32 %s28, 1
      %s34 = ssub.s32 %s28, 2
      %s41 = sadd.s32 1, %s36
      %p42 = scmp.ge.s32.totalorder %s41, 1
      %s43 = scalar_select %p42, 0, %s41
      %s44 = sadd.s32 1, %s35
      %s45 = scalar_select %p42, %s44, %s35
      %p46 = scmp.ge.s32.totalorder %s45, 2
      %s47 = scalar_select %p46, 0, %s45
      %s48 = ssub.s32 %s35, %s47
      %p49 = scmp.eq.s32.totalorder %s48, 0
      %s51 = sadd.s32 %s50, 1
      %s52 = scalar_select %p49, %s50, %s51
      %p55 = pneg %p49
      %p56 = scmp.eq.s32.totalorder %s28, 1
      %p57 = por %p55, %p56
      %p58 = scmp.ne.s32.totalorder %s50, %s53
      %p59 = scmp.eq.s32.totalorder %s28, 0
      %p60 = por %p58, %p59
      %p61 = scmp.ne.s32.totalorder %s50, %s53
      %p62 = scmp.eq.s32.totalorder %s33, 1
      %p63 = por %p61, %p62
      %p64 = scmp.ne.s32.totalorder %s53, %s54
      %p65 = scmp.eq.s32.totalorder %s33, 0
      %p66 = por %p64, %p65
      %p67 = scmp.ne.s32.totalorder %s53, %s54
      %p68 = scmp.eq.s32.totalorder %s34, 1
      %p69 = por %p67, %p68
      %p71 = scmp.ne.s32.totalorder %s54, %s70
      %p72 = scmp.eq.s32.totalorder %s34, 0
      %p73 = por %p71, %p72
      %s75 = sadd.s32 %s74, 1
      %p78 = scmp.eq.s32.totalorder %s28, 1
      %p79 = scmp.ne.s32.totalorder %s74, %s76
      %p80 = scmp.eq.s32.totalorder %s28, 0
      %p81 = por %p79, %p80
      %p82 = scmp.ne.s32.totalorder %s74, %s76
      %p83 = scmp.eq.s32.totalorder %s33, 1
      %p84 = por %p82, %p83
      %p85 = scmp.ne.s32.totalorder %s76, %s77
      %p86 = scmp.eq.s32.totalorder %s33, 0
      %p87 = por %p85, %p86
      %p88 = scmp.ne.s32.totalorder %s76, %s77
      %p89 = scmp.eq.s32.totalorder %s34, 1
      %p90 = por %p88, %p89
      %p92 = scmp.ne.s32.totalorder %s77, %s91
      %p93 = scmp.eq.s32.totalorder %s34, 0
      %p94 = por %p92, %p93
      %s96 = sadd.s32 %s95, 1
      %p99 = scmp.eq.s32.totalorder %s28, 1
      %p100 = scmp.ne.s32.totalorder %s95, %s97
      %p101 = scmp.eq.s32.totalorder %s28, 0
      %p102 = por %p100, %p101
      %p103 = scmp.ne.s32.totalorder %s95, %s97
      %p104 = scmp.eq.s32.totalorder %s33, 1
      %p105 = por %p103, %p104
      %p106 = scmp.ne.s32.totalorder %s97, %s98
      %p107 = scmp.eq.s32.totalorder %s33, 0
      %p108 = por %p106, %p107
      %p109 = scmp.ne.s32.totalorder %s97, %s98
      %p110 = scmp.eq.s32.totalorder %s34, 1
      %p111 = por %p109, %p110
      %p113 = scmp.ne.s32.totalorder %s98, %s112
      %p114 = scmp.eq.s32.totalorder %s34, 0
      %p115 = por %p113, %p114
      %s117 = sadd.s32 %s116, 1
      %p120 = scmp.eq.s32.totalorder %s28, 1
      %p121 = scmp.ne.s32.totalorder %s116, %s118
      %p122 = scmp.eq.s32.totalorder %s28, 0
      %p123 = por %p121, %p122
      %p124 = scmp.ne.s32.totalorder %s116, %s118
      %p125 = scmp.eq.s32.totalorder %s33, 1
      %p126 = por %p124, %p125
      %p127 = scmp.ne.s32.totalorder %s118, %s119
      %p128 = scmp.eq.s32.totalorder %s33, 0
      %p129 = por %p127, %p128
      %p130 = scmp.ne.s32.totalorder %s118, %s119
      %p131 = scmp.eq.s32.totalorder %s34, 1
      %p132 = por %p130, %p131
      %p134 = scmp.ne.s32.totalorder %s119, %s133
      %p135 = scmp.eq.s32.totalorder %s34, 0
      %p136 = por %p134, %p135
      %s138 = sadd.s32 %s137, 1
      %p141 = scmp.eq.s32.totalorder %s28, 1
      %p142 = scmp.ne.s32.totalorder %s137, %s139
      %p143 = scmp.eq.s32.totalorder %s28, 0
      %p144 = por %p142, %p143
      %p145 = scmp.ne.s32.totalorder %s137, %s139
      %p146 = scmp.eq.s32.totalorder %s33, 1
      %p147 = por %p145, %p146
      %p148 = scmp.ne.s32.totalorder %s139, %s140
      %p149 = scmp.eq.s32.totalorder %s33, 0
      %p150 = por %p148, %p149
      %p151 = scmp.ne.s32.totalorder %s139, %s140
      %p152 = scmp.eq.s32.totalorder %s34, 1
      %p153 = por %p151, %p152
      %p155 = scmp.ne.s32.totalorder %s140, %s154
      %p156 = scmp.eq.s32.totalorder %s34, 0
      %p157 = por %p155, %p156
      %s159 = sadd.s32 %s158, 1
      %p162 = scmp.eq.s32.totalorder %s28, 1
      %p163 = scmp.ne.s32.totalorder %s158, %s160
      %p164 = scmp.eq.s32.totalorder %s28, 0
      %p165 = por %p163, %p164
      %p166 = scmp.ne.s32.totalorder %s158, %s160
      %p167 = scmp.eq.s32.totalorder %s33, 1
      %p168 = por %p166, %p167
      %p169 = scmp.ne.s32.totalorder %s160, %s161
      %p170 = scmp.eq.s32.totalorder %s33, 0
      %p171 = por %p169, %p170
      %p172 = scmp.ne.s32.totalorder %s160, %s161
      %p173 = scmp.eq.s32.totalorder %s34, 1
      %p174 = por %p172, %p173
      %p176 = scmp.ne.s32.totalorder %s161, %s175
      %p177 = scmp.eq.s32.totalorder %s34, 0
      %p178 = por %p176, %p177
      %s180 = sadd.s32 %s179, 1
      %p183 = scmp.eq.s32.totalorder %s28, 1
      %p184 = scmp.ne.s32.totalorder %s179, %s181
      %p185 = scmp.eq.s32.totalorder %s28, 0
      %p186 = por %p184, %p185
      %p187 = scmp.ne.s32.totalorder %s179, %s181
      %p188 = scmp.eq.s32.totalorder %s33, 1
      %p189 = por %p187, %p188
      %p190 = scmp.ne.s32.totalorder %s181, %s182
      %p191 = scmp.eq.s32.totalorder %s33, 0
      %p192 = por %p190, %p191
      %p193 = scmp.ne.s32.totalorder %s181, %s182
      %p194 = scmp.eq.s32.totalorder %s34, 1
      %p195 = por %p193, %p194
      %p197 = scmp.ne.s32.totalorder %s182, %s196
      %p198 = scmp.eq.s32.totalorder %s34, 0
      %p199 = por %p197, %p198
      %s201 = sadd.s32 %s200, 1
      %p204 = scmp.eq.s32.totalorder %s28, 1
      %p205 = scmp.ne.s32.totalorder %s200, %s202
      %p206 = scmp.eq.s32.totalorder %s28, 0
      %p207 = por %p205, %p206
      %p208 = scmp.ne.s32.totalorder %s200, %s202
      %p209 = scmp.eq.s32.totalorder %s33, 1
      %p210 = por %p208, %p209
      %p211 = scmp.ne.s32.totalorder %s202, %s203
      %p212 = scmp.eq.s32.totalorder %s33, 0
      %p213 = por %p211, %p212
      %p214 = scmp.ne.s32.totalorder %s202, %s203
      %p215 = scmp.eq.s32.totalorder %s34, 1
      %p216 = por %p214, %p215
      %p218 = scmp.ne.s32.totalorder %s203, %s217
      %p219 = scmp.eq.s32.totalorder %s34, 0
      %p220 = por %p218, %p219
      %s222 = sadd.s32 %s221, 1
      %p225 = scmp.eq.s32.totalorder %s28, 1
      %p226 = scmp.ne.s32.totalorder %s221, %s223
      %p227 = scmp.eq.s32.totalorder %s28, 0
      %p228 = por %p226, %p227
      %p229 = scmp.ne.s32.totalorder %s221, %s223
      %p230 = scmp.eq.s32.totalorder %s33, 1
      %p231 = por %p229, %p230
      %p232 = scmp.ne.s32.totalorder %s223, %s224
      %p233 = scmp.eq.s32.totalorder %s33, 0
      %p234 = por %p232, %p233
      %p235 = scmp.ne.s32.totalorder %s223, %s224
      %p236 = scmp.eq.s32.totalorder %s34, 1
      %p237 = por %p235, %p236
      %p239 = scmp.ne.s32.totalorder %s224, %s238
      %p240 = scmp.eq.s32.totalorder %s34, 0
      %p241 = por %p239, %p240
      %s242 = ssub.s32 %s35, %s47
      %p243 = scmp.eq.s32.totalorder %s242, 0
      %s245 = sadd.s32 %s244, 1
      %s246 = scalar_select %p243, %s244, %s245
      %p249 = pneg %p243
      %p250 = scmp.eq.s32.totalorder %s28, 1
      %p251 = por %p249, %p250
      %p252 = scmp.ne.s32.totalorder %s244, %s247
      %p253 = scmp.eq.s32.totalorder %s28, 0
      %p254 = por %p252, %p253
      %p255 = scmp.ne.s32.totalorder %s244, %s247
      %p256 = scmp.eq.s32.totalorder %s33, 1
      %p257 = por %p255, %p256
      %p258 = scmp.ne.s32.totalorder %s247, %s248
      %p259 = scmp.eq.s32.totalorder %s33, 0
      %p260 = por %p258, %p259
      %p261 = scmp.ne.s32.totalorder %s247, %s248
      %p262 = scmp.eq.s32.totalorder %s34, 1
      %p263 = por %p261, %p262
      %p265 = scmp.ne.s32.totalorder %s248, %s264
      %p266 = scmp.eq.s32.totalorder %s34, 0
      %p267 = por %p265, %p266
      %s268 = ssub.s32 %s36, %s43
      %s269 = ssub.s32 %s35, %s47
      %s270 = sor.u32 %s268, %s269
      %p271 = scmp.eq.s32.totalorder %s270, 0
      %s273 = sadd.s32 %s272, 1
      %s274 = scalar_select %p271, %s272, %s273
      %p277 = pneg %p271
      %p278 = scmp.eq.s32.totalorder %s28, 1
      %p279 = por %p277, %p278
      %p280 = scmp.ne.s32.totalorder %s272, %s275
      %p281 = scmp.eq.s32.totalorder %s28, 0
      %p282 = por %p280, %p281
      %p283 = scmp.ne.s32.totalorder %s272, %s275
      %p284 = scmp.eq.s32.totalorder %s33, 1
      %p285 = por %p283, %p284
      %p286 = scmp.ne.s32.totalorder %s275, %s276
      %p287 = scmp.eq.s32.totalorder %s33, 0
      %p288 = por %p286, %p287
      %p289 = scmp.ne.s32.totalorder %s275, %s276
      %p290 = scmp.eq.s32.totalorder %s34, 1
      %p291 = por %p289, %p290
      %p293 = scmp.ne.s32.totalorder %s276, %s292
      %p294 = scmp.eq.s32.totalorder %s34, 0
      %p295 = por %p293, %p294
      %p296 = scmp.le.s32.totalorder 1, %s28
      %p297 = scmp.lt.s32.totalorder %s28, 3
      %p298 = pnand %p296, %p297
      %p299 = pneg %p298
      // Predicated region
      $region9: #{tpu_custom_call.1} parent=5 // pred_check
        _
      $region10: #{tpu_custom_call.1} parent=5 // pred_check_branch
        %301 = sbr.rel (%p298) target = $region12
      $region11: #{tpu_custom_call.1} parent=5 // pred_region
        %s302 = ssub.s32 %s28, 1
        // Predicated region
        $region13: #{tpu_custom_call.1} parent=11 // pred_check
          %p303 = pneg %p87
        $region14: #{tpu_custom_call.1} parent=11 // pred_check_branch
          %305 = sbr.rel (%p303) target = $region16
        $region15: #{tpu_custom_call.1} parent=11 // pred_region
          %s307 = ssub.s32 512, 512
          %308 = vsyncadd [#allocation7], %s307
          %s309 = sshll.u32 [#allocation6], 4
          %s310 = int_to_ptr.vmem [resolvable:$true] %s309
          %315 = dma.hbm_to_vmem [thread:$0]  %s1, 512, %s310, [#allocation7], 128, 128, 8
        $region16: #{tpu_custom_call.1} parent=11 // pred_fallthru
          _
        // Predicated region
        $region17: #{tpu_custom_call.1} parent=11 // pred_check
          %p316 = pneg %p108
        $region18: #{tpu_custom_call.1} parent=11 // pred_check_branch
          %318 = sbr.rel (%p316) target = $region20
        $region19: #{tpu_custom_call.1} parent=11 // pred_region
          _
        $region20: #{tpu_custom_call.1} parent=11 // pred_fallthru
          _
        // Predicated region
        $region21: #{tpu_custom_call.1} parent=11 // pred_check
          %p319 = pneg %p129
        $region22: #{tpu_custom_call.1} parent=11 // pred_check_branch
          %321 = sbr.rel (%p319) target = $region24
        $region23: #{tpu_custom_call.1} parent=11 // pred_region
          %s323 = ssub.s32 512, 512
          %324 = vsyncadd [#allocation7], %s323
          %s325 = sshll.u32 [#allocation8], 4
          %s326 = int_to_ptr.vmem [resolvable:$true] %s325
          %331 = dma.hbm_to_vmem [thread:$0]  %s3, 512, %s326, [#allocation7], 128, 128, 8
        $region24: #{tpu_custom_call.1} parent=11 // pred_fallthru
          _
        // Predicated region
        $region25: #{tpu_custom_call.1} parent=11 // pred_check
          %p332 = pneg %p150
        $region26: #{tpu_custom_call.1} parent=11 // pred_check_branch
          %334 = sbr.rel (%p332) target = $region28
        $region27: #{tpu_custom_call.1} parent=11 // pred_region
          _
        $region28: #{tpu_custom_call.1} parent=11 // pred_fallthru
          _
        // Predicated region
        $region29: #{tpu_custom_call.1} parent=11 // pred_check
          %p335 = pneg %p171
        $region30: #{tpu_custom_call.1} parent=11 // pred_check_branch
          %337 = sbr.rel (%p335) target = $region32
        $region31: #{tpu_custom_call.1} parent=11 // pred_region
          %s339 = ssub.s32 512, 512
          %340 = vsyncadd [#allocation10], %s339
          %s341 = sshll.u32 [#allocation9], 4
          %s342 = int_to_ptr.vmem [resolvable:$true] %s341
          %347 = dma.hbm_to_vmem [thread:$0]  %s5, 512, %s342, [#allocation10], 128, 128, 8
        $region32: #{tpu_custom_call.1} parent=11 // pred_fallthru
          _
        // Predicated region
        $region33: #{tpu_custom_call.1} parent=11 // pred_check
          %p348 = pneg %p192
        $region34: #{tpu_custom_call.1} parent=11 // pred_check_branch
          %350 = sbr.rel (%p348) target = $region36
        $region35: #{tpu_custom_call.1} parent=11 // pred_region
          _
        $region36: #{tpu_custom_call.1} parent=11 // pred_fallthru
          _
        // Predicated region
        $region37: #{tpu_custom_call.1} parent=11 // pred_check
          %p351 = pneg %p213
        $region38: #{tpu_custom_call.1} parent=11 // pred_check_branch
          %353 = sbr.rel (%p351) target = $region40
        $region39: #{tpu_custom_call.1} parent=11 // pred_region
          %s355 = ssub.s32 512, 512
          %356 = vsyncadd [#allocation10], %s355
          %s357 = sshll.u32 [#allocation11], 4
          %s358 = int_to_ptr.vmem [resolvable:$true] %s357
          %363 = dma.hbm_to_vmem [thread:$0]  %s7, 512, %s358, [#allocation10], 128, 128, 8
        $region40: #{tpu_custom_call.1} parent=11 // pred_fallthru
          _
        // Predicated region
        $region41: #{tpu_custom_call.1} parent=11 // pred_check
          %p364 = pneg %p234
        $region42: #{tpu_custom_call.1} parent=11 // pred_check_branch
          %366 = sbr.rel (%p364) target = $region44
        $region43: #{tpu_custom_call.1} parent=11 // pred_region
          _
        $region44: #{tpu_custom_call.1} parent=11 // pred_fallthru
          _
      $region12: #{tpu_custom_call.1} parent=5 // pred_fallthru
        _
      %p367 = scmp.lt.s32.totalorder %s28, 2
      // Predicated region
      $region45: #{tpu_custom_call.1} parent=5 // pred_check
        %p368 = pneg %p367
      $region46: #{tpu_custom_call.1} parent=5 // pred_check_branch
        %370 = sbr.rel (%p368) target = $region48
      $region47: #{tpu_custom_call.1} parent=5 // pred_region
        // Predicated region
        $region49: #{tpu_custom_call.1} parent=47 // pred_check
          %p371 = pneg %p60
        $region50: #{tpu_custom_call.1} parent=47 // pred_check_branch
          %373 = sbr.rel (%p371) target = $region52
        $region51: #{tpu_custom_call.1} parent=47 // pred_region
          %s374 = sand.u32 %s50, 1
          %s375 = scalar_lea.sflag [#allocation4], %s374
          %s376 = sand.u32 %s50, 1
          %s377 = smul.addr %s376, 8
          %s378 = scalar_lea.vmem [#allocation3], %s377
          %s380 = ssub.s32 128, 128
          %381 = vsyncadd %s375, %s380
          %s382 = smul.addr %s35, 128
          %s383 = scalar_lea.hbm %s0, %s382
          %s385 = sshll.u32 %s378, 4
          %s386 = int_to_ptr.vmem [resolvable:$true] %s385
          %388 = dma.hbm_to_vmem [thread:$0]  %s383, 128, %s386, %s375
        $region52: #{tpu_custom_call.1} parent=47 // pred_fallthru
          _
      $region48: #{tpu_custom_call.1} parent=5 // pred_fallthru
        _
      %p389 = scmp.le.s32.totalorder 1, %s28
      %p390 = scmp.lt.s32.totalorder %s28, 3
      %p391 = pnand %p389, %p390
      %p392 = pneg %p391
      // Predicated region
      $region53: #{tpu_custom_call.1} parent=5 // pred_check
        _
      $region54: #{tpu_custom_call.1} parent=5 // pred_check_branch
        %394 = sbr.rel (%p391) target = $region56
      $region55: #{tpu_custom_call.1} parent=5 // pred_region
        %s395 = ssub.s32 %s28, 1
        %s396 = sand.u32 %s53, 1
        %s397 = scalar_lea.sflag [#allocation4], %s396
        %s398 = sand.u32 %s53, 1
        %s399 = smul.addr %s398, 8
        %s400 = scalar_lea.vmem [#allocation3], %s399
        // Predicated region
        $region57: #{tpu_custom_call.1} parent=55 // pred_check
          %p401 = pneg %p66
        $region58: #{tpu_custom_call.1} parent=55 // pred_check_branch
          %403 = sbr.rel (%p401) target = $region60
        $region59: #{tpu_custom_call.1} parent=55 // pred_region
          %404 = dma.done %s397, 128
        $region60: #{tpu_custom_call.1} parent=55 // pred_fallthru
          _
        // Predicated region
        $region61: #{tpu_custom_call.1} parent=55 // pred_check
          %p405 = pneg %p87
        $region62: #{tpu_custom_call.1} parent=55 // pred_check_branch
          %407 = sbr.rel (%p405) target = $region64
        $region63: #{tpu_custom_call.1} parent=55 // pred_region
          %408 = dma.done [#allocation7], 512
        $region64: #{tpu_custom_call.1} parent=55 // pred_fallthru
          _
        // Predicated region
        $region65: #{tpu_custom_call.1} parent=55 // pred_check
          %p409 = pneg %p129
        $region66: #{tpu_custom_call.1} parent=55 // pred_check_branch
          %411 = sbr.rel (%p409) target = $region68
        $region67: #{tpu_custom_call.1} parent=55 // pred_region
          %412 = dma.done [#allocation7], 512
        $region68: #{tpu_custom_call.1} parent=55 // pred_fallthru
          _
        // Predicated region
        $region69: #{tpu_custom_call.1} parent=55 // pred_check
          %p413 = pneg %p171
        $region70: #{tpu_custom_call.1} parent=55 // pred_check_branch
          %415 = sbr.rel (%p413) target = $region72
        $region71: #{tpu_custom_call.1} parent=55 // pred_region
          %416 = dma.done [#allocation10], 512
        $region72: #{tpu_custom_call.1} parent=55 // pred_fallthru
          _
        // Predicated region
        $region73: #{tpu_custom_call.1} parent=55 // pred_check
          %p417 = pneg %p213
        $region74: #{tpu_custom_call.1} parent=55 // pred_check_branch
          %419 = sbr.rel (%p417) target = $region76
        $region75: #{tpu_custom_call.1} parent=55 // pred_region
          %420 = dma.done [#allocation10], 512
        $region76: #{tpu_custom_call.1} parent=55 // pred_fallthru
          _
        %s421 = sand.u32 %s53, 1
        %s422 = scalar_lea.sflag [#allocation4], %s421
        %s423 = sand.u32 %s53, 1
        %s424 = smul.addr %s423, 8
        %s425 = scalar_lea.vmem [#allocation3], %s424
        %p426 = pneg %p66
        %p427 = pneg %p63
        %p428 = pneg %p87
        %p429 = pneg %p84
        %p430 = pneg %p108
        %p431 = pneg %p105
        %p432 = pneg %p129
        %p433 = pneg %p126
        %p434 = pneg %p150
        %p435 = pneg %p147
        %p436 = pneg %p171
        %p437 = pneg %p168
        %p438 = pneg %p192
        %p439 = pneg %p189
        %p440 = pneg %p213
        %p441 = pneg %p210
        %p442 = pneg %p234
        %p443 = pneg %p231
        %p444 = pneg %p260
        %p445 = pneg %p257
        %s446 = sand.u32 %s247, 1
        %s447 = scalar_lea.sflag [#allocation5], %s446
        %s448 = sand.u32 %s247, 1
        %s449 = smul.addr %s448, 8
        %s450 = scalar_lea.vmem [#allocation12], %s449
        %p451 = pneg %p288
        %p452 = pneg %p285
        %s453 = sand.u32 %s275, 1
        %s454 = scalar_lea.sflag [#allocation14], %s453
        %s455 = sand.u32 %s275, 1
        %s456 = smul.addr %s455, 16
        %s457 = scalar_lea.vmem [#allocation13], %s456
        %s458 = smul.u32 2, %s38
        %v459 = vld [vmem:[%s400] sm:$0xff]
        %s460 = smul.u32 %s38, 32
        %s461 = scalar_lea.vmem [#allocation6], %s460
        %v462 = vld [vmem:[%s461] sm:$0xff]
        %v463 = vld [vmem:[%s461 + $0x8] sm:$0xff]
        %v464 = vld [vmem:[%s461 + $0x10] sm:$0xff]
        %v465 = vld [vmem:[%s461 + $0x18] sm:$0xff]
        %s466 = scalar_lea.vmem %s2, %s38
        %v467 = vld [vmem:[%s466] sm:$0x1]
        %v469 = vlaneseq
        %v470 = vshrl.u32 %v469, 7
        %v471 = vsub.s32 0, %v470
        %v472 = vrot.slane %v467, %v471
        %vm474 = vcmask 261120
        %v476 = vsel %vm474, %v459, 0
        %478 = vmatprep.subr.mxu0 0.0
        %479 = vmatpush1.msra.mxu0 %v462
        %480 = vmatprep.subr.mxu0 0.0
        %481 = vmatpush1.msra.mxu0 %v463
        %482 = vmatprep.subr.mxu0 0.0
        %483 = vmatpush1.msra.mxu0 %v464
        %484 = vmatprep.subr.mxu0 0.0
        %485 = vmatpush1.msra.mxu0 %v465
        %486 = vmatprep.subr.mxu0 0.0
        %487 = vmatpush1.msra.mxu0 0.0
        %488 = vmatprep.subr.mxu0 0.0
        %489 = vmatpush1.msra.mxu0 0.0
        %490 = vmatprep.subr.mxu0 0.0
        %491 = vmatpush1.msra.mxu0 0.0
        %492 = vmatprep.subr.mxu0 0.0
        %493 = vmatpush1.msra.mxu0 0.0
        %494 = vmatprep.subr.mxu0 0.0
        %495 = vmatpush1.msra.mxu0 0.0
        %496 = vmatprep.subr.mxu0 0.0
        %497 = vmatpush1.msra.mxu0 0.0
        %498 = vmatprep.subr.mxu0 0.0
        %499 = vmatpush1.msra.mxu0 0.0
        %500 = vmatprep.subr.mxu0 0.0
        %501 = vmatpush1.msra.mxu0 0.0
        %502 = vmatprep.subr.mxu0 0.0
        %503 = vmatpush1.msra.mxu0 0.0
        %504 = vmatprep.subr.mxu0 0.0
        %505 = vmatpush1.msra.mxu0 0.0
        %506 = vmatprep.subr.mxu0 0.0
        %507 = vmatpush1.msra.mxu0 0.0
        %508 = vmatprep.subr.mxu0 0.0
        %509 = vmatpush1.msra.mxu0 0.0
        %510 = vmatprep.subr.mxu0 0.0
        %511 = vmatpush1.msra.mxu0 0.0
        %512 = vmatprep.subr.mxu0 0.0
        %513 = vmatpush1.msra.mxu0 0.0
        %514 = vmatprep.subr.mxu0 0.0
        %515 = vmatpush1.msra.mxu0 0.0
        %516 = vmatprep.subr.mxu0 0.0
        %517 = vmatpush1.msra.mxu0 0.0
        %518 = vmatprep.subr.mxu0 0.0
        %519 = vmatpush1.msra.mxu0 0.0
        %520 = vmatprep.subr.mxu0 0.0
        %521 = vmatpush1.msra.mxu0 0.0
        %522 = vmatprep.subr.mxu0 0.0
        %523 = vmatpush1.msra.mxu0 0.0
        %524 = vmatprep.subr.mxu0 0.0
        %525 = vmatpush1.msra.mxu0 0.0
        %526 = vmatprep.subr.mxu0 0.0
        %527 = vmatpush1.msra.mxu0 0.0
        %528 = vmatprep.subr.mxu0 0.0
        %529 = vmatpush1.msra.mxu0 0.0
        %530 = vmatprep.subr.mxu0 0.0
        %531 = vmatpush1.msra.mxu0 0.0
        %532 = vmatprep.subr.mxu0 0.0
        %533 = vmatpush1.msra.mxu0 0.0
        %534 = vmatprep.subr.mxu0 0.0
        %535 = vmatpush1.msra.mxu0 0.0
        %536 = vmatprep.subr.mxu0 0.0
        %537 = vmatpush1.msra.mxu0 0.0
        %538 = vmatprep.subr.mxu0 0.0
        %539 = vmatpush1.msra.mxu0 0.0
        %540 = vmatprep.subr.mxu0 0.0
        %541 = vmatpush1.msra.mxu0 0.0
        %542 = vmatprep.mubr.f32.mxu0 0.0
        %543 = vmatmul.mubr.f32.gmra.mrb[0].mxu0 %v476
        %v544 = vpop.f32.mrb[0].mxu0
        %v545 = vadd.f32 %v472, %v544
        %v546 = vpop.f32.mrb[0].mxu0
        %547 = vdwg.mxu0
        %v548 = vmul.f32 %v545, 0.17677669
        %s549 = scalar_lea.vmem [#allocation8], %s460
        %v550 = vld [vmem:[%s549] sm:$0xff]
        %v551 = vld [vmem:[%s549 + $0x8] sm:$0xff]
        %v552 = vld [vmem:[%s549 + $0x10] sm:$0xff]
        %v553 = vld [vmem:[%s549 + $0x18] sm:$0xff]
        %s554 = scalar_lea.vmem %s4, %s38
        %v555 = vld [vmem:[%s554] sm:$0x1]
        %v557 = vlaneseq
        %v558 = vshrl.u32 %v557, 7
        %v559 = vsub.s32 0, %v558
        %v560 = vrot.slane %v555, %v559
        %562 = vmatprep.subr.mxu0 0.0
        %563 = vmatpush1.msra.mxu0 %v550
        %564 = vmatprep.subr.mxu0 0.0
        %565 = vmatpush1.msra.mxu0 %v551
        %566 = vmatprep.subr.mxu0 0.0
        %567 = vmatpush1.msra.mxu0 %v552
        %568 = vmatprep.subr.mxu0 0.0
        %569 = vmatpush1.msra.mxu0 %v553
        %570 = vmatprep.subr.mxu0 0.0
        %571 = vmatpush1.msra.mxu0 0.0
        %572 = vmatprep.subr.mxu0 0.0
        %573 = vmatpush1.msra.mxu0 0.0
        %574 = vmatprep.subr.mxu0 0.0
        %575 = vmatpush1.msra.mxu0 0.0
        %576 = vmatprep.subr.mxu0 0.0
        %577 = vmatpush1.msra.mxu0 0.0
        %578 = vmatprep.subr.mxu0 0.0
        %579 = vmatpush1.msra.mxu0 0.0
        %580 = vmatprep.subr.mxu0 0.0
        %581 = vmatpush1.msra.mxu0 0.0
        %582 = vmatprep.subr.mxu0 0.0
        %583 = vmatpush1.msra.mxu0 0.0
        %584 = vmatprep.subr.mxu0 0.0
        %585 = vmatpush1.msra.mxu0 0.0
        %586 = vmatprep.subr.mxu0 0.0
        %587 = vmatpush1.msra.mxu0 0.0
        %588 = vmatprep.subr.mxu0 0.0
        %589 = vmatpush1.msra.mxu0 0.0
        %590 = vmatprep.subr.mxu0 0.0
        %591 = vmatpush1.msra.mxu0 0.0
        %592 = vmatprep.subr.mxu0 0.0
        %593 = vmatpush1.msra.mxu0 0.0
        %594 = vmatprep.subr.mxu0 0.0
        %595 = vmatpush1.msra.mxu0 0.0
        %596 = vmatprep.subr.mxu0 0.0
        %597 = vmatpush1.msra.mxu0 0.0
        %598 = vmatprep.subr.mxu0 0.0
        %599 = vmatpush1.msra.mxu0 0.0
        %600 = vmatprep.subr.mxu0 0.0
        %601 = vmatpush1.msra.mxu0 0.0
        %602 = vmatprep.subr.mxu0 0.0
        %603 = vmatpush1.msra.mxu0 0.0
        %604 = vmatprep.subr.mxu0 0.0
        %605 = vmatpush1.msra.mxu0 0.0
        %606 = vmatprep.subr.mxu0 0.0
        %607 = vmatpush1.msra.mxu0 0.0
        %608 = vmatprep.subr.mxu0 0.0
        %609 = vmatpush1.msra.mxu0 0.0
        %610 = vmatprep.subr.mxu0 0.0
        %611 = vmatpush1.msra.mxu0 0.0
        %612 = vmatprep.subr.mxu0 0.0
        %613 = vmatpush1.msra.mxu0 0.0
        %614 = vmatprep.subr.mxu0 0.0
        %615 = vmatpush1.msra.mxu0 0.0
        %616 = vmatprep.subr.mxu0 0.0
        %617 = vmatpush1.msra.mxu0 0.0
        %618 = vmatprep.subr.mxu0 0.0
        %619 = vmatpush1.msra.mxu0 0.0
        %620 = vmatprep.subr.mxu0 0.0
        %621 = vmatpush1.msra.mxu0 0.0
        %622 = vmatprep.subr.mxu0 0.0
        %623 = vmatpush1.msra.mxu0 0.0
        %624 = vmatprep.subr.mxu0 0.0
        %625 = vmatpush1.msra.mxu0 0.0
        %626 = vmatprep.mubr.f32.mxu0 0.0
        %627 = vmatmul.mubr.f32.gmra.mrb[0].mxu0 %v476
        %v628 = vpop.f32.mrb[0].mxu0
        %v629 = vadd.f32 %v560, %v628
        %v630 = vpop.f32.mrb[0].mxu0
        %631 = vdwg.mxu0
        %s632 = scalar_lea.vmem [#allocation9], %s460
        %v633 = vld [vmem:[%s632] sm:$0xff]
        %v634 = vld [vmem:[%s632 + $0x8] sm:$0xff]
        %v635 = vld [vmem:[%s632 + $0x10] sm:$0xff]
        %v636 = vld [vmem:[%s632 + $0x18] sm:$0xff]
        %s637 = scalar_lea.vmem %s6, %s38
        %v638 = vld [vmem:[%s637] sm:$0x1]
        %v640 = vlaneseq
        %v641 = vshrl.u32 %v640, 7
        %v642 = vsub.s32 0, %v641
        %v643 = vrot.slane %v638, %v642
        %645 = vmatprep.subr.mxu0 0.0
        %646 = vmatpush1.msra.mxu0 %v633
        %647 = vmatprep.subr.mxu0 0.0
        %648 = vmatpush1.msra.mxu0 %v634
        %649 = vmatprep.subr.mxu0 0.0
        %650 = vmatpush1.msra.mxu0 %v635
        %651 = vmatprep.subr.mxu0 0.0
        %652 = vmatpush1.msra.mxu0 %v636
        %653 = vmatprep.subr.mxu0 0.0
        %654 = vmatpush1.msra.mxu0 0.0
        %655 = vmatprep.subr.mxu0 0.0
        %656 = vmatpush1.msra.mxu0 0.0
        %657 = vmatprep.subr.mxu0 0.0
        %658 = vmatpush1.msra.mxu0 0.0
        %659 = vmatprep.subr.mxu0 0.0
        %660 = vmatpush1.msra.mxu0 0.0
        %661 = vmatprep.subr.mxu0 0.0
        %662 = vmatpush1.msra.mxu0 0.0
        %663 = vmatprep.subr.mxu0 0.0
        %664 = vmatpush1.msra.mxu0 0.0
        %665 = vmatprep.subr.mxu0 0.0
        %666 = vmatpush1.msra.mxu0 0.0
        %667 = vmatprep.subr.mxu0 0.0
        %668 = vmatpush1.msra.mxu0 0.0
        %669 = vmatprep.subr.mxu0 0.0
        %670 = vmatpush1.msra.mxu0 0.0
        %671 = vmatprep.subr.mxu0 0.0
        %672 = vmatpush1.msra.mxu0 0.0
        %673 = vmatprep.subr.mxu0 0.0
        %674 = vmatpush1.msra.mxu0 0.0
        %675 = vmatprep.subr.mxu0 0.0
        %676 = vmatpush1.msra.mxu0 0.0
        %677 = vmatprep.subr.mxu0 0.0
        %678 = vmatpush1.msra.mxu0 0.0
        %679 = vmatprep.subr.mxu0 0.0
        %680 = vmatpush1.msra.mxu0 0.0
        %681 = vmatprep.subr.mxu0 0.0
        %682 = vmatpush1.msra.mxu0 0.0
        %683 = vmatprep.subr.mxu0 0.0
        %684 = vmatpush1.msra.mxu0 0.0
        %685 = vmatprep.subr.mxu0 0.0
        %686 = vmatpush1.msra.mxu0 0.0
        %687 = vmatprep.subr.mxu0 0.0
        %688 = vmatpush1.msra.mxu0 0.0
        %689 = vmatprep.subr.mxu0 0.0
        %690 = vmatpush1.msra.mxu0 0.0
        %691 = vmatprep.subr.mxu0 0.0
        %692 = vmatpush1.msra.mxu0 0.0
        %693 = vmatprep.subr.mxu0 0.0
        %694 = vmatpush1.msra.mxu0 0.0
        %695 = vmatprep.subr.mxu0 0.0
        %696 = vmatpush1.msra.mxu0 0.0
        %697 = vmatprep.subr.mxu0 0.0
        %698 = vmatpush1.msra.mxu0 0.0
        %699 = vmatprep.subr.mxu0 0.0
        %700 = vmatpush1.msra.mxu0 0.0
        %701 = vmatprep.subr.mxu0 0.0
        %702 = vmatpush1.msra.mxu0 0.0
        %703 = vmatprep.subr.mxu0 0.0
        %704 = vmatpush1.msra.mxu0 0.0
        %705 = vmatprep.subr.mxu0 0.0
        %706 = vmatpush1.msra.mxu0 0.0
        %707 = vmatprep.subr.mxu0 0.0
        %708 = vmatpush1.msra.mxu0 0.0
        %709 = vmatprep.mubr.f32.mxu0 0.0
        %710 = vmatmul.mubr.f32.gmra.mrb[0].mxu0 %v476
        %v711 = vpop.f32.mrb[0].mxu0
        %v712 = vadd.f32 %v643, %v711
        %v713 = vpop.f32.mrb[0].mxu0
        %714 = vdwg.mxu0
        %vm715 = vcmask 130048
        %v717 = vsel %vm715, %v548, 0
        %v720 = vsel %vm715, %v629, 0
        %722 = vmatprep.subr.mxu0 0.0
        %723 = vmatpush1.xpose.msra.mxu0 %v720
        %724 = vmatprep.subr.mxu0 0.0
        %725 = vmatpush1.xpose.msra.mxu0 0.0
        %726 = vmatprep.subr.mxu0 0.0
        %727 = vmatpush1.xpose.msra.mxu0 0.0
        %728 = vmatprep.subr.mxu0 0.0
        %729 = vmatpush1.xpose.msra.mxu0 0.0
        %730 = vmatprep.subr.mxu0 0.0
        %731 = vmatpush1.xpose.msra.mxu0 0.0
        %732 = vmatprep.subr.mxu0 0.0
        %733 = vmatpush1.xpose.msra.mxu0 0.0
        %734 = vmatprep.subr.mxu0 0.0
        %735 = vmatpush1.xpose.msra.mxu0 0.0
        %736 = vmatprep.subr.mxu0 0.0
        %737 = vmatpush1.xpose.msra.mxu0 0.0
        %738 = vmatprep.subr.mxu0 0.0
        %739 = vmatpush1.xpose.msra.mxu0 0.0
        %740 = vmatprep.subr.mxu0 0.0
        %741 = vmatpush1.xpose.msra.mxu0 0.0
        %742 = vmatprep.subr.mxu0 0.0
        %743 = vmatpush1.xpose.msra.mxu0 0.0
        %744 = vmatprep.subr.mxu0 0.0
        %745 = vmatpush1.xpose.msra.mxu0 0.0
        %746 = vmatprep.subr.mxu0 0.0
        %747 = vmatpush1.xpose.msra.mxu0 0.0
        %748 = vmatprep.subr.mxu0 0.0
        %749 = vmatpush1.xpose.msra.mxu0 0.0
        %750 = vmatprep.subr.mxu0 0.0
        %751 = vmatpush1.xpose.msra.mxu0 0.0
        %752 = vmatprep.subr.mxu0 0.0
        %753 = vmatpush1.xpose.msra.mxu0 0.0
        %754 = vmatprep.subr.mxu0 0.0
        %755 = vmatpush1.xpose.msra.mxu0 0.0
        %756 = vmatprep.subr.mxu0 0.0
        %757 = vmatpush1.xpose.msra.mxu0 0.0
        %758 = vmatprep.subr.mxu0 0.0
        %759 = vmatpush1.xpose.msra.mxu0 0.0
        %760 = vmatprep.subr.mxu0 0.0
        %761 = vmatpush1.xpose.msra.mxu0 0.0
        %762 = vmatprep.subr.mxu0 0.0
        %763 = vmatpush1.xpose.msra.mxu0 0.0
        %764 = vmatprep.subr.mxu0 0.0
        %765 = vmatpush1.xpose.msra.mxu0 0.0
        %766 = vmatprep.subr.mxu0 0.0
        %767 = vmatpush1.xpose.msra.mxu0 0.0
        %768 = vmatprep.subr.mxu0 0.0
        %769 = vmatpush1.xpose.msra.mxu0 0.0
        %770 = vmatprep.subr.mxu0 0.0
        %771 = vmatpush1.xpose.msra.mxu0 0.0
        %772 = vmatprep.subr.mxu0 0.0
        %773 = vmatpush1.xpose.msra.mxu0 0.0
        %774 = vmatprep.subr.mxu0 0.0
        %775 = vmatpush1.xpose.msra.mxu0 0.0
        %776 = vmatprep.subr.mxu0 0.0
        %777 = vmatpush1.xpose.msra.mxu0 0.0
        %778 = vmatprep.subr.mxu0 0.0
        %779 = vmatpush1.xpose.msra.mxu0 0.0
        %780 = vmatprep.subr.mxu0 0.0
        %781 = vmatpush1.xpose.msra.mxu0 0.0
        %782 = vmatprep.subr.mxu0 0.0
        %783 = vmatpush1.xpose.msra.mxu0 0.0
        %784 = vmatprep.subr.mxu0 0.0
        %785 = vmatpush1.xpose.msra.mxu0 0.0
        %786 = vmatprep.mubr.f32.mxu0 0.0
        %787 = vmatmul.mubr.f32.gmra.mrb[0].mxu0 %v717
        %v788 = vpop.f32.mrb[0].mxu0
        %v789 = vadd.f32 0.0, %v788
        %v790 = vpop.f32.mrb[0].mxu0
        %791 = vdwg.mxu0
        %vm792 = vcmask 64512
        %v793 = vsel %vm792, %v789, -inf
        %794 = vmax.xlane.f32.xlu0 %v793
        %v795 = vpop.xlane.xlu0 %794
        %v796 = vsub.f32 %v789, %v795
        %v797 = vmul.f32 %v796, 1.442695
        %v798 = vpow.pop %v797
        %v799 = vsel %vm792, %v798, 0.0
        %800 = vadd.xlane.f32.xlu0 %v799
        %v801 = vpop.xlane.xlu0 %800
        %v802 = vrcp.pop %v801
        %v803 = vmul.f32 %v798, %v802
        %804 = vst.msk [vmem:[%s457] sm:$0xff] %vm792, %v803
        %v806 = vsel %vm792, %v803, 0
        %808 = vmatprep.subr.mxu0 0.0
        %809 = vmatpush1.msra.mxu0 %v712
        %810 = vmatprep.subr.mxu0 0.0
        %811 = vmatpush1.msra.mxu0 0.0
        %812 = vmatprep.subr.mxu0 0.0
        %813 = vmatpush1.msra.mxu0 0.0
        %814 = vmatprep.subr.mxu0 0.0
        %815 = vmatpush1.msra.mxu0 0.0
        %816 = vmatprep.subr.mxu0 0.0
        %817 = vmatpush1.msra.mxu0 0.0
        %818 = vmatprep.subr.mxu0 0.0
        %819 = vmatpush1.msra.mxu0 0.0
        %820 = vmatprep.subr.mxu0 0.0
        %821 = vmatpush1.msra.mxu0 0.0
        %822 = vmatprep.subr.mxu0 0.0
        %823 = vmatpush1.msra.mxu0 0.0
        %824 = vmatprep.subr.mxu0 0.0
        %825 = vmatpush1.msra.mxu0 0.0
        %826 = vmatprep.subr.mxu0 0.0
        %827 = vmatpush1.msra.mxu0 0.0
        %828 = vmatprep.subr.mxu0 0.0
        %829 = vmatpush1.msra.mxu0 0.0
        %830 = vmatprep.subr.mxu0 0.0
        %831 = vmatpush1.msra.mxu0 0.0
        %832 = vmatprep.subr.mxu0 0.0
        %833 = vmatpush1.msra.mxu0 0.0
        %834 = vmatprep.subr.mxu0 0.0
        %835 = vmatpush1.msra.mxu0 0.0
        %836 = vmatprep.subr.mxu0 0.0
        %837 = vmatpush1.msra.mxu0 0.0
        %838 = vmatprep.subr.mxu0 0.0
        %839 = vmatpush1.msra.mxu0 0.0
        %840 = vmatprep.subr.mxu0 0.0
        %841 = vmatpush1.msra.mxu0 0.0
        %842 = vmatprep.subr.mxu0 0.0
        %843 = vmatpush1.msra.mxu0 0.0
        %844 = vmatprep.subr.mxu0 0.0
        %845 = vmatpush1.msra.mxu0 0.0
        %846 = vmatprep.subr.mxu0 0.0
        %847 = vmatpush1.msra.mxu0 0.0
        %848 = vmatprep.subr.mxu0 0.0
        %849 = vmatpush1.msra.mxu0 0.0
        %850 = vmatprep.subr.mxu0 0.0
        %851 = vmatpush1.msra.mxu0 0.0
        %852 = vmatprep.subr.mxu0 0.0
        %853 = vmatpush1.msra.mxu0 0.0
        %854 = vmatprep.subr.mxu0 0.0
        %855 = vmatpush1.msra.mxu0 0.0
        %856 = vmatprep.subr.mxu0 0.0
        %857 = vmatpush1.msra.mxu0 0.0
        %858 = vmatprep.subr.mxu0 0.0
        %859 = vmatpush1.msra.mxu0 0.0
        %860 = vmatprep.subr.mxu0 0.0
        %861 = vmatpush1.msra.mxu0 0.0
        %862 = vmatprep.subr.mxu0 0.0
        %863 = vmatpush1.msra.mxu0 0.0
        %864 = vmatprep.subr.mxu0 0.0
        %865 = vmatpush1.msra.mxu0 0.0
        %866 = vmatprep.subr.mxu0 0.0
        %867 = vmatpush1.msra.mxu0 0.0
        %868 = vmatprep.subr.mxu0 0.0
        %869 = vmatpush1.msra.mxu0 0.0
        %870 = vmatprep.subr.mxu0 0.0
        %871 = vmatpush1.msra.mxu0 0.0
        %872 = vmatprep.mubr.f32.mxu0 0.0
        %873 = vmatmul.mubr.f32.gmra.mrb[0].mxu0 %v806
        %v874 = vpop.f32.mrb[0].mxu0
        %v875 = vadd.f32 0.0, %v874
        %v876 = vpop.f32.mrb[0].mxu0
        %877 = vdwg.mxu0
        %878 = vrot.lane.b32.xlu0 %v548, 112
        %v879 = vpop.permute.xlu0 %878
        %880 = vrot.lane.b32.xlu0 %v629, 112
        %v881 = vpop.permute.xlu0 %880
        %v882 = vsel %vm715, %v879, 0
        %v884 = vsel %vm715, %v881, 0
        %886 = vmatprep.subr.mxu0 0.0
        %887 = vmatpush1.xpose.msra.mxu0 %v884
        %888 = vmatprep.subr.mxu0 0.0
        %889 = vmatpush1.xpose.msra.mxu0 0.0
        %890 = vmatprep.subr.mxu0 0.0
        %891 = vmatpush1.xpose.msra.mxu0 0.0
        %892 = vmatprep.subr.mxu0 0.0
        %893 = vmatpush1.xpose.msra.mxu0 0.0
        %894 = vmatprep.subr.mxu0 0.0
        %895 = vmatpush1.xpose.msra.mxu0 0.0
        %896 = vmatprep.subr.mxu0 0.0
        %897 = vmatpush1.xpose.msra.mxu0 0.0
        %898 = vmatprep.subr.mxu0 0.0
        %899 = vmatpush1.xpose.msra.mxu0 0.0
        %900 = vmatprep.subr.mxu0 0.0
        %901 = vmatpush1.xpose.msra.mxu0 0.0
        %902 = vmatprep.subr.mxu0 0.0
        %903 = vmatpush1.xpose.msra.mxu0 0.0
        %904 = vmatprep.subr.mxu0 0.0
        %905 = vmatpush1.xpose.msra.mxu0 0.0
        %906 = vmatprep.subr.mxu0 0.0
        %907 = vmatpush1.xpose.msra.mxu0 0.0
        %908 = vmatprep.subr.mxu0 0.0
        %909 = vmatpush1.xpose.msra.mxu0 0.0
        %910 = vmatprep.subr.mxu0 0.0
        %911 = vmatpush1.xpose.msra.mxu0 0.0
        %912 = vmatprep.subr.mxu0 0.0
        %913 = vmatpush1.xpose.msra.mxu0 0.0
        %914 = vmatprep.subr.mxu0 0.0
        %915 = vmatpush1.xpose.msra.mxu0 0.0
        %916 = vmatprep.subr.mxu0 0.0
        %917 = vmatpush1.xpose.msra.mxu0 0.0
        %918 = vmatprep.subr.mxu0 0.0
        %919 = vmatpush1.xpose.msra.mxu0 0.0
        %920 = vmatprep.subr.mxu0 0.0
        %921 = vmatpush1.xpose.msra.mxu0 0.0
        %922 = vmatprep.subr.mxu0 0.0
        %923 = vmatpush1.xpose.msra.mxu0 0.0
        %924 = vmatprep.subr.mxu0 0.0
        %925 = vmatpush1.xpose.msra.mxu0 0.0
        %926 = vmatprep.subr.mxu0 0.0
        %927 = vmatpush1.xpose.msra.mxu0 0.0
        %928 = vmatprep.subr.mxu0 0.0
        %929 = vmatpush1.xpose.msra.mxu0 0.0
        %930 = vmatprep.subr.mxu0 0.0
        %931 = vmatpush1.xpose.msra.mxu0 0.0
        %932 = vmatprep.subr.mxu0 0.0
        %933 = vmatpush1.xpose.msra.mxu0 0.0
        %934 = vmatprep.subr.mxu0 0.0
        %935 = vmatpush1.xpose.msra.mxu0 0.0
        %936 = vmatprep.subr.mxu0 0.0
        %937 = vmatpush1.xpose.msra.mxu0 0.0
        %938 = vmatprep.subr.mxu0 0.0
        %939 = vmatpush1.xpose.msra.mxu0 0.0
        %940 = vmatprep.subr.mxu0 0.0
        %941 = vmatpush1.xpose.msra.mxu0 0.0
        %942 = vmatprep.subr.mxu0 0.0
        %943 = vmatpush1.xpose.msra.mxu0 0.0
        %944 = vmatprep.subr.mxu0 0.0
        %945 = vmatpush1.xpose.msra.mxu0 0.0
        %946 = vmatprep.subr.mxu0 0.0
        %947 = vmatpush1.xpose.msra.mxu0 0.0
        %948 = vmatprep.subr.mxu0 0.0
        %949 = vmatpush1.xpose.msra.mxu0 0.0
        %950 = vmatprep.mubr.f32.mxu0 0.0
        %951 = vmatmul.mubr.f32.gmra.mrb[0].mxu0 %v882
        %v952 = vpop.f32.mrb[0].mxu0
        %v953 = vadd.f32 0.0, %v952
        %v954 = vpop.f32.mrb[0].mxu0
        %955 = vdwg.mxu0
        %v956 = vsel %vm792, %v953, -inf
        %957 = vmax.xlane.f32.xlu0 %v956
        %v958 = vpop.xlane.xlu0 %957
        %v959 = vsub.f32 %v953, %v958
        %v960 = vmul.f32 %v959, 1.442695
        %v961 = vpow.pop %v960
        %v962 = vsel %vm792, %v961, 0.0
        %963 = vadd.xlane.f32.xlu0 %v962
        %v964 = vpop.xlane.xlu0 %963
        %v965 = vrcp.pop %v964
        %v966 = vmul.f32 %v961, %v965
        %s967 = scalar_lea.vmem %s457, 8 [#allocation13]
        %968 = vst.msk [vmem:[%s967] sm:$0xff] %vm792, %v966
        %970 = vrot.lane.b32.xlu0 %v712, 112
        %v971 = vpop.permute.xlu0 %970
        %v974 = vsel %vm792, %v966, 0
        %976 = vmatprep.subr.mxu0 0.0
        %977 = vmatpush1.msra.mxu0 %v971
        %978 = vmatprep.subr.mxu0 0.0
        %979 = vmatpush1.msra.mxu0 0.0
        %980 = vmatprep.subr.mxu0 0.0
        %981 = vmatpush1.msra.mxu0 0.0
        %982 = vmatprep.subr.mxu0 0.0
        %983 = vmatpush1.msra.mxu0 0.0
        %984 = vmatprep.subr.mxu0 0.0
        %985 = vmatpush1.msra.mxu0 0.0
        %986 = vmatprep.subr.mxu0 0.0
        %987 = vmatpush1.msra.mxu0 0.0
        %988 = vmatprep.subr.mxu0 0.0
        %989 = vmatpush1.msra.mxu0 0.0
        %990 = vmatprep.subr.mxu0 0.0
        %991 = vmatpush1.msra.mxu0 0.0
        %992 = vmatprep.subr.mxu0 0.0
        %993 = vmatpush1.msra.mxu0 0.0
        %994 = vmatprep.subr.mxu0 0.0
        %995 = vmatpush1.msra.mxu0 0.0
        %996 = vmatprep.subr.mxu0 0.0
        %997 = vmatpush1.msra.mxu0 0.0
        %998 = vmatprep.subr.mxu0 0.0
        %999 = vmatpush1.msra.mxu0 0.0
        %1000 = vmatprep.subr.mxu0 0.0
        %1001 = vmatpush1.msra.mxu0 0.0
        %1002 = vmatprep.subr.mxu0 0.0
        %1003 = vmatpush1.msra.mxu0 0.0
        %1004 = vmatprep.subr.mxu0 0.0
        %1005 = vmatpush1.msra.mxu0 0.0
        %1006 = vmatprep.subr.mxu0 0.0
        %1007 = vmatpush1.msra.mxu0 0.0
        %1008 = vmatprep.subr.mxu0 0.0
        %1009 = vmatpush1.msra.mxu0 0.0
        %1010 = vmatprep.subr.mxu0 0.0
        %1011 = vmatpush1.msra.mxu0 0.0
        %1012 = vmatprep.subr.mxu0 0.0
        %1013 = vmatpush1.msra.mxu0 0.0
        %1014 = vmatprep.subr.mxu0 0.0
        %1015 = vmatpush1.msra.mxu0 0.0
        %1016 = vmatprep.subr.mxu0 0.0
        %1017 = vmatpush1.msra.mxu0 0.0
        %1018 = vmatprep.subr.mxu0 0.0
        %1019 = vmatpush1.msra.mxu0 0.0
        %1020 = vmatprep.subr.mxu0 0.0
        %1021 = vmatpush1.msra.mxu0 0.0
        %1022 = vmatprep.subr.mxu0 0.0
        %1023 = vmatpush1.msra.mxu0 0.0
        %1024 = vmatprep.subr.mxu0 0.0
        %1025 = vmatpush1.msra.mxu0 0.0
        %1026 = vmatprep.subr.mxu0 0.0
        %1027 = vmatpush1.msra.mxu0 0.0
        %1028 = vmatprep.subr.mxu0 0.0
        %1029 = vmatpush1.msra.mxu0 0.0
        %1030 = vmatprep.subr.mxu0 0.0
        %1031 = vmatpush1.msra.mxu0 0.0
        %1032 = vmatprep.subr.mxu0 0.0
        %1033 = vmatpush1.msra.mxu0 0.0
        %1034 = vmatprep.subr.mxu0 0.0
        %1035 = vmatpush1.msra.mxu0 0.0
        %1036 = vmatprep.subr.mxu0 0.0
        %1037 = vmatpush1.msra.mxu0 0.0
        %1038 = vmatprep.subr.mxu0 0.0
        %1039 = vmatpush1.msra.mxu0 0.0
        %1040 = vmatprep.mubr.f32.mxu0 0.0
        %1041 = vmatmul.mubr.f32.gmra.mrb[0].mxu0 %v974
        %v1042 = vpop.f32.mrb[0].mxu0
        %v1043 = vadd.f32 0.0, %v1042
        %v1044 = vpop.f32.mrb[0].mxu0
        %1045 = vdwg.mxu0
        %1047 = vrot.lane.b32.xlu0 %v1043, 16
        %v1048 = vpop.permute.xlu0 %1047
        %v1050 = vsel %vm715, %v875, %v1048
        %s1051 = scalar_lea.vmem [#allocation11], %s460
        %v1052 = vld [vmem:[%s1051] sm:$0xff]
        %v1053 = vld [vmem:[%s1051 + $0x8] sm:$0xff]
        %v1054 = vld [vmem:[%s1051 + $0x10] sm:$0xff]
        %v1055 = vld [vmem:[%s1051 + $0x18] sm:$0xff]
        %v1057 = vsel %vm474, %v1050, 0
        %1059 = vmatprep.subr.mxu0 0.0
        %1060 = vmatpush1.msra.mxu0 %v1052
        %1061 = vmatprep.subr.mxu0 0.0
        %1062 = vmatpush1.msra.mxu0 %v1053
        %1063 = vmatprep.subr.mxu0 0.0
        %1064 = vmatpush1.msra.mxu0 %v1054
        %1065 = vmatprep.subr.mxu0 0.0
        %1066 = vmatpush1.msra.mxu0 %v1055
        %1067 = vmatprep.subr.mxu0 0.0
        %1068 = vmatpush1.msra.mxu0 0.0
        %1069 = vmatprep.subr.mxu0 0.0
        %1070 = vmatpush1.msra.mxu0 0.0
        %1071 = vmatprep.subr.mxu0 0.0
        %1072 = vmatpush1.msra.mxu0 0.0
        %1073 = vmatprep.subr.mxu0 0.0
        %1074 = vmatpush1.msra.mxu0 0.0
        %1075 = vmatprep.subr.mxu0 0.0
        %1076 = vmatpush1.msra.mxu0 0.0
        %1077 = vmatprep.subr.mxu0 0.0
        %1078 = vmatpush1.msra.mxu0 0.0
        %1079 = vmatprep.subr.mxu0 0.0
        %1080 = vmatpush1.msra.mxu0 0.0
        %1081 = vmatprep.subr.mxu0 0.0
        %1082 = vmatpush1.msra.mxu0 0.0
        %1083 = vmatprep.subr.mxu0 0.0
        %1084 = vmatpush1.msra.mxu0 0.0
        %1085 = vmatprep.subr.mxu0 0.0
        %1086 = vmatpush1.msra.mxu0 0.0
        %1087 = vmatprep.subr.mxu0 0.0
        %1088 = vmatpush1.msra.mxu0 0.0
        %1089 = vmatprep.subr.mxu0 0.0
        %1090 = vmatpush1.msra.mxu0 0.0
        %1091 = vmatprep.subr.mxu0 0.0
        %1092 = vmatpush1.msra.mxu0 0.0
        %1093 = vmatprep.subr.mxu0 0.0
        %1094 = vmatpush1.msra.mxu0 0.0
        %1095 = vmatprep.subr.mxu0 0.0
        %1096 = vmatpush1.msra.mxu0 0.0
        %1097 = vmatprep.subr.mxu0 0.0
        %1098 = vmatpush1.msra.mxu0 0.0
        %1099 = vmatprep.subr.mxu0 0.0
        %1100 = vmatpush1.msra.mxu0 0.0
        %1101 = vmatprep.subr.mxu0 0.0
        %1102 = vmatpush1.msra.mxu0 0.0
        %1103 = vmatprep.subr.mxu0 0.0
        %1104 = vmatpush1.msra.mxu0 0.0
        %1105 = vmatprep.subr.mxu0 0.0
        %1106 = vmatpush1.msra.mxu0 0.0
        %1107 = vmatprep.subr.mxu0 0.0
        %1108 = vmatpush1.msra.mxu0 0.0
        %1109 = vmatprep.subr.mxu0 0.0
        %1110 = vmatpush1.msra.mxu0 0.0
        %1111 = vmatprep.subr.mxu0 0.0
        %1112 = vmatpush1.msra.mxu0 0.0
        %1113 = vmatprep.subr.mxu0 0.0
        %1114 = vmatpush1.msra.mxu0 0.0
        %1115 = vmatprep.subr.mxu0 0.0
        %1116 = vmatpush1.msra.mxu0 0.0
        %1117 = vmatprep.subr.mxu0 0.0
        %1118 = vmatpush1.msra.mxu0 0.0
        %1119 = vmatprep.subr.mxu0 0.0
        %1120 = vmatpush1.msra.mxu0 0.0
        %1121 = vmatprep.subr.mxu0 0.0
        %1122 = vmatpush1.msra.mxu0 0.0
        %1123 = vmatprep.mubr.f32.mxu0 0.0
        %1124 = vmatmul.mubr.f32.gmra.mrb[0].mxu0 %v1057
        %v1125 = vpop.f32.mrb[0].mxu0
        %v1126 = vadd.f32 0.0, %v1125
        %v1127 = vpop.f32.mrb[0].mxu0
        %1128 = vdwg.mxu0
        %p1129 = scmp.eq.s32.totalorder %s38, 0
        // Predicated region
        $region77: #{tpu_custom_call.1} parent=55 // pred_check
          %p1130 = pneg %p1129
        $region78: #{tpu_custom_call.1} parent=55 // pred_check_branch
          %1132 = sbr.rel (%p1130) target = $region80
        $region79: #{tpu_custom_call.1} parent=55 // pred_region
          %v1133 = vld [vmem:[%s400] sm:$0xff]
          %v1134 = vld [vmem:[%s8] sm:$0x1]
          %v1136 = vlaneseq
          %v1137 = vshrl.u32 %v1136, 7
          %v1138 = vsub.s32 0, %v1137
          %v1139 = vrot.slane %v1134, %v1138
          %v1141 = vadd.f32 %v1133, %v1139
          %v1142 = vadd.f32 %v1141, %v1126
          %1143 = vst.msk [vmem:[#allocation2] sm:$0xff] %vm474, %v1142
        $region80: #{tpu_custom_call.1} parent=55 // pred_fallthru
          _
        %p1144 = scmp.ne.s32.totalorder %s38, 0
        // Predicated region
        $region81: #{tpu_custom_call.1} parent=55 // pred_check
          %p1145 = pneg %p1144
        $region82: #{tpu_custom_call.1} parent=55 // pred_check_branch
          %1147 = sbr.rel (%p1145) target = $region84
        $region83: #{tpu_custom_call.1} parent=55 // pred_region
          %v1148 = vld [vmem:[#allocation2] sm:$0xff]
          %v1149 = vadd.f32 %v1148, %v1126
          %1150 = vst.msk [vmem:[#allocation2] sm:$0xff] %vm474, %v1149
        $region84: #{tpu_custom_call.1} parent=55 // pred_fallthru
          _
        // Predicated region
        $region85: #{tpu_custom_call.1} parent=55 // pred_check
          %p1151 = pneg %p1129
        $region86: #{tpu_custom_call.1} parent=55 // pred_check_branch
          %1153 = sbr.rel (%p1151) target = $region88
        $region87: #{tpu_custom_call.1} parent=55 // pred_region
          %v1154 = vld [vmem:[#allocation2] sm:$0xff]
          %1155 = vst.msk [vmem:[%s450] sm:$0xff] %vm474, %v1154
        $region88: #{tpu_custom_call.1} parent=55 // pred_fallthru
          _
        %s1156 = sand.u32 %s247, 1
        %s1157 = scalar_lea.sflag [#allocation5], %s1156
        %s1158 = sand.u32 %s247, 1
        %s1159 = smul.addr %s1158, 8
        %s1160 = scalar_lea.vmem [#allocation12], %s1159
        %s1161 = sand.u32 %s275, 1
        %s1162 = scalar_lea.sflag [#allocation14], %s1161
        %s1163 = sand.u32 %s275, 1
        %s1164 = smul.addr %s1163, 16
        %s1165 = scalar_lea.vmem [#allocation13], %s1164
        // Predicated region
        $region89: #{tpu_custom_call.1} parent=55 // pred_check
          %p1166 = pneg %p257
        $region90: #{tpu_custom_call.1} parent=55 // pred_check_branch
          %1168 = sbr.rel (%p1166) target = $region92
        $region91: #{tpu_custom_call.1} parent=55 // pred_region
          %s1170 = ssub.s32 128, 128
          %1171 = vsyncadd %s1157, %s1170
          %s1172 = smul.addr %s37, 128
          %s1173 = scalar_lea.hbm %s9, %s1172
          %s1175 = sshll.u32 %s1160, 4
          %s1176 = int_to_ptr.vmem [resolvable:$true] %s1175
          %1178 = dma.vmem_to_hbm [thread:$0]  %s1176, 128, %s1173, %s1157
        $region92: #{tpu_custom_call.1} parent=55 // pred_fallthru
          _
        // Predicated region
        $region93: #{tpu_custom_call.1} parent=55 // pred_check
          %p1179 = pneg %p285
        $region94: #{tpu_custom_call.1} parent=55 // pred_check_branch
          %1181 = sbr.rel (%p1179) target = $region96
        $region95: #{tpu_custom_call.1} parent=55 // pred_region
          %s1182 = smul.u32 2, %s38
          %s1184 = ssub.s32 256, 256
          %1185 = vsyncadd %s1162, %s1184
          %s1186 = smul.addr %s1182, 2
          %s1187 = sadd.s32 %s37, %s1186
          %s1188 = smul.addr %s1187, 128
          %s1189 = scalar_lea.hbm %s10, %s1188
          %s1190 = sshll.u32 %s1165, 4
          %s1191 = int_to_ptr.vmem [resolvable:$true] %s1190
          %1196 = dma.vmem_to_hbm [thread:$0]  %s1191, 256, %s1189, %s1162, 128, 256, 8
        $region96: #{tpu_custom_call.1} parent=55 // pred_fallthru
          _
      $region56: #{tpu_custom_call.1} parent=5 // pred_fallthru
        _
      %p1197 = scmp.le.s32.totalorder 2, %s28
      // Predicated region
      $region97: #{tpu_custom_call.1} parent=5 // pred_check
        %p1198 = pneg %p1197
      $region98: #{tpu_custom_call.1} parent=5 // pred_check_branch
        %1200 = sbr.rel (%p1198) target = $region100
      $region99: #{tpu_custom_call.1} parent=5 // pred_region
        %s1201 = ssub.s32 %s28, 2
        // Predicated region
        $region101: #{tpu_custom_call.1} parent=99 // pred_check
          %p1202 = pneg %p263
        $region102: #{tpu_custom_call.1} parent=99 // pred_check_branch
          %1204 = sbr.rel (%p1202) target = $region104
        $region103: #{tpu_custom_call.1} parent=99 // pred_region
          %s1205 = sand.u32 %s248, 1
          %s1206 = scalar_lea.sflag [#allocation5], %s1205
          %s1207 = sand.u32 %s248, 1
          %s1208 = smul.addr %s1207, 8
          %s1209 = scalar_lea.vmem [#allocation12], %s1208
          %1210 = dma.done %s1206, 128
        $region104: #{tpu_custom_call.1} parent=99 // pred_fallthru
          _
        // Predicated region
        $region105: #{tpu_custom_call.1} parent=99 // pred_check
          %p1211 = pneg %p291
        $region106: #{tpu_custom_call.1} parent=99 // pred_check_branch
          %1213 = sbr.rel (%p1211) target = $region108
        $region107: #{tpu_custom_call.1} parent=99 // pred_region
          %s1214 = sand.u32 %s276, 1
          %s1215 = scalar_lea.sflag [#allocation14], %s1214
          %s1216 = sand.u32 %s276, 1
          %s1217 = smul.addr %s1216, 16
          %s1218 = scalar_lea.vmem [#allocation13], %s1217
          %1219 = dma.done %s1215, 256
        $region108: #{tpu_custom_call.1} parent=99 // pred_fallthru
          _
      $region100: #{tpu_custom_call.1} parent=5 // pred_fallthru
        _
    $region6: #{tpu_custom_call.1} parent=1 // loop_footer
      %s32 = sadd.s32 1, %s28
    $region7: #{tpu_custom_call.1} parent=1 // loop_footer_branch
      %27 = sbr.rel target = $region3
    $region8: #{tpu_custom_call.1} parent=1 // loop_exit
      _
    %1220 = vsyncpa [#allocation4], 1
    %s1221 = scalar_lea.sflag [#allocation4], 1
    %1222 = vsyncpa %s1221, 1
    %1223 = vsyncpa [#allocation7], 1
    %1224 = vsyncpa [#allocation10], 1
    %1225 = vsyncpa [#allocation5], 1
    %s1226 = scalar_lea.sflag [#allocation5], 1
    %1227 = vsyncpa %s1226, 1
    %1228 = vsyncpa [#allocation14], 1
    %s1229 = scalar_lea.sflag [#allocation14], 1
    %1230 = vsyncpa %s1229, 1

</llo_original>
